<compile_context>
chip_gen: v5e
topology: v5e:2x2
jax: 0.10.0
libtpu: 0.0.40
codegen_flags: <defaults>
</compile_context>

<pallas_src>
import functools

import jax
import jax.numpy as jnp
from jax import lax
from jax.experimental import pallas as pl
from jax.experimental.pallas import tpu as pltpu

NEG_INF = -1e30


def sae_attention_kernel(x_ref, w_enc_ref, b_enc_ref, b_dec_ref, w_dec_ref,
                         wq_ref, wk_ref, wv_ref, bq_ref, bk_ref, bv_ref,
                         wo_ref, bo_ref, seg_ref, segt_ref, out_ref, *, k):
    x = x_ref[...]                                    # (TB, D) f32
    b_dec = b_dec_ref[...]                            # (1, D)  f32
    tb, d_in = x.shape

    # ---- encoder + ReLU (bf16 matmul operands, f32 MXU accumulation) ----
    sae_in = x - b_dec
    pre = jnp.dot(sae_in.astype(jnp.bfloat16), w_enc_ref[...],
                  preferred_element_type=jnp.float32)
    pre = jnp.maximum(pre + b_enc_ref[...], 0.0)      # (TB, hidden) f32

    # ---- top-k per row via iterative max elimination (k unrolled passes) ----
    # Ties with the k-th value are all kept; an all-zero row degenerates harmlessly
    # to z == 0 because the scattered value is the activation itself.
    # TODO(synk): exact torch.topk index tie-breaking not reproduced (identical for
    # continuous activations); for large k switch to a count-based binary search.
    def tk_body(_, carry):
        work, _ = carry
        thr = jnp.max(work, axis=1, keepdims=True)
        return jnp.where(work >= thr, NEG_INF, work), thr

    _, thr = lax.fori_loop(0, k, tk_body,
                           (pre, jnp.zeros((tb, 1), jnp.float32)),
                           unroll=True)
    z = jnp.where(pre >= thr, pre, 0.0)

    # ---- decoder ----
    x_rec0 = jnp.dot(z.astype(jnp.bfloat16), w_dec_ref[...],
                     preferred_element_type=jnp.float32) + b_dec   # (TB, D)

    # ---- multi-head attention over the 2-token sequence [x, x_rec0]; only the
    #      token-1 output row is needed (x_reconstructed = attn_out[:, 1]).
    #      K / V projections are fused over both tokens along the batch axis
    #      (5 separate dots -> 3, with doubled M for K and V). ----
    # TODO(synk): full [Wq|Wk|Wv] (d_in, 3*d_in) column fusion once d_in is a
    # multiple of the 128-lane tile so the post-matmul column split is lane-aligned.
    x2 = jnp.concatenate([x, x_rec0], axis=0).astype(jnp.bfloat16)  # (2TB, D)
    k2 = jnp.dot(x2, wk_ref[...], preferred_element_type=jnp.float32) + bk_ref[...]
    v2 = jnp.dot(x2, wv_ref[...], preferred_element_type=jnp.float32) + bv_ref[...]
    q1 = jnp.dot(x_rec0.astype(jnp.bfloat16), wq_ref[...],
                 preferred_element_type=jnp.float32) + bq_ref[...]  # (TB, D)
    k0, k1 = k2[:tb], k2[tb:]
    v0, v1 = v2[:tb], v2[tb:]

    # Per-head score reduction on the MXU: seg (D, H) is 0/1 pre-scaled by
    # 1/sqrt(head_dim); segT (H, D) broadcasts per-head probs back to lanes.
    seg = seg_ref[...]
    s0 = jnp.dot(q1 * k0, seg, preferred_element_type=jnp.float32)  # (TB, H)
    s1 = jnp.dot(q1 * k1, seg, preferred_element_type=jnp.float32)
    m = jnp.maximum(s0, s1)
    e0 = jnp.exp(s0 - m)
    e1 = jnp.exp(s1 - m)
    p0 = e0 * pl.reciprocal(e0 + e1, approx=True)                   # (TB, H)
    p0_full = jnp.dot(p0, segt_ref[...], preferred_element_type=jnp.float32)
    # p1_full == 1 - p0_full on every lane, so one broadcast suffices.
    attn = v1 + p0_full * (v0 - v1)                                 # (TB, D)

    out = jnp.dot(attn.astype(jnp.bfloat16), wo_ref[...],
                  preferred_element_type=jnp.float32) + bo_ref[...]
    # TODO(synk): at d_in < 128 this store is lane-masked; production d_in >= 128
    # gives a dense 128-lane writeback.
    out_ref[...] = out


def sae_attention_forward(x, params, *, k, num_heads, tb=128):
    B, d_in = x.shape
    hidden = params["w_enc"].shape[1]
    assert d_in % num_heads == 0
    dh = d_in // num_heads

    # Pad the batch up to a multiple of the batch tile (zero rows are harmless).
    tb = min(tb, B)
    Bp = -(-B // tb) * tb
    xp = jnp.pad(x, ((0, Bp - B), (0, 0))) if Bp != B else x

    # Static head-segment matrices: seg maps lanes -> heads (with the attention
    # scale folded in); segT maps heads -> lanes for the probability broadcast.
    head_of_lane = jnp.arange(d_in) // dh
    seg = (head_of_lane[:, None] == jnp.arange(num_heads)[None, :]).astype(jnp.float32)
    seg = seg / jnp.sqrt(jnp.float32(dh))
    segt = (jnp.arange(num_heads)[:, None] == head_of_lane[None, :]).astype(jnp.float32)

    def full2d(shape):
        return pl.BlockSpec(shape, lambda i: (0, 0))

    flops = 2 * Bp * hidden * d_in * 2              # encoder + decoder
    flops += 2 * (2 * Bp) * d_in * d_in * 2         # K, V for both tokens
    flops += 2 * Bp * d_in * d_in * 2               # Q (token 1) + out proj
    flops += 2 * Bp * d_in * num_heads * 3          # head reduce / broadcast matmuls
    weight_bytes = sum(int(params[n].size) * 2 for n in
                       ("w_enc", "w_dec", "wq", "wk", "wv", "wo"))
    bias_bytes = sum(int(params[n].size) * 4 for n in
                     ("b_enc", "b_dec", "bq", "bk", "bv", "bo"))
    cost = pl.CostEstimate(
        flops=int(flops),
        transcendentals=int(3 * Bp * num_heads),
        bytes_accessed=int(xp.size * 4 + Bp * d_in * 4 + weight_bytes + bias_bytes
                           + (seg.size + segt.size) * 4))

    kern = functools.partial(sae_attention_kernel, k=k)
    # TODO(synk): for production SAE sizes (hidden = d_in * scale >> this toy), tile
    # the hidden dim as a second "arbitrary" grid axis with a VMEM accumulator for
    # the decoder (two-pass top-k) so W_enc/W_dec slices fit v7x's 64 MiB VMEM.
    out = pl.pallas_call(
        kern,
        out_shape=jax.ShapeDtypeStruct((Bp, d_in), jnp.float32),
        grid=(Bp // tb,),
        in_specs=[
            pl.BlockSpec((tb, d_in), lambda i: (i, 0)),   # x (tiled over batch)
            full2d((d_in, hidden)),                       # W_enc^T  (bf16)
            full2d((1, hidden)),                          # b_enc
            full2d((1, d_in)),                            # b_dec
            full2d((hidden, d_in)),                       # W_dec    (bf16)
            full2d((d_in, d_in)),                         # Wq^T     (bf16)
            full2d((d_in, d_in)),                         # Wk^T     (bf16)
            full2d((d_in, d_in)),                         # Wv^T     (bf16)
            full2d((1, d_in)),                            # bq
            full2d((1, d_in)),                            # bk
            full2d((1, d_in)),                            # bv
            full2d((d_in, d_in)),                         # Wo^T     (bf16)
            full2d((1, d_in)),                            # bo
            full2d((d_in, num_heads)),                    # seg  (scaled 0/1)
            full2d((num_heads, d_in)),                    # segT (0/1)
        ],
        out_specs=pl.BlockSpec((tb, d_in), lambda i: (i, 0)),
        compiler_params=pltpu.CompilerParams(dimension_semantics=("parallel",)),
        cost_estimate=cost,
    )(xp, params["w_enc"], params["b_enc"], params["b_dec"], params["w_dec"],
      params["wq"], params["wk"], params["wv"],
      params["bq"], params["bk"], params["bv"],
      params["wo"], params["bo"], seg, segt)
    return out[:B]


def init_params(key, d_in, scale_size):
    """Deterministic synthetic init matching the torch __init__ shapes.
    Matmul weights are stored (and DMA'd) in bf16; biases stay f32."""
    hidden = d_in * scale_size
    k0, k1, k2 = jax.random.split(key, 3)
    # encoder: Linear(d_in, hidden) -> weight (hidden, d_in), bias zeroed
    w_enc_torch = jax.random.normal(k0, (hidden, d_in), jnp.float32) / jnp.sqrt(d_in)
    b_enc = jnp.zeros((1, hidden), jnp.float32)
    # W_dec = encoder.weight.clone(), rows normalized to unit norm (dim=1)
    eps = jnp.finfo(jnp.float32).eps
    norm = jnp.sqrt(jnp.sum(w_enc_torch ** 2, axis=1, keepdims=True))
    w_dec = w_enc_torch / (norm + eps)                       # (hidden, d_in)
    b_dec = jnp.zeros((1, d_in), jnp.float32)
    # MultiheadAttention: in_proj_weight (3*d_in, d_in), in_proj_bias zeros,
    # out_proj weight (d_in, d_in), out_proj bias zeros.
    in_proj_w = jax.random.normal(k1, (3 * d_in, d_in), jnp.float32) / jnp.sqrt(d_in)
    in_proj_b = jnp.zeros((3 * d_in,), jnp.float32)
    wo_torch = jax.random.normal(k2, (d_in, d_in), jnp.float32) / jnp.sqrt(d_in)
    bo = jnp.zeros((1, d_in), jnp.float32)
    wq_t, wk_t, wv_t = (in_proj_w[:d_in], in_proj_w[d_in:2 * d_in],
                        in_proj_w[2 * d_in:])
    bf16 = jnp.bfloat16
    return dict(
        w_enc=w_enc_torch.T.astype(bf16),             # (d_in, hidden)
        b_enc=b_enc,
        b_dec=b_dec,
        w_dec=w_dec.astype(bf16),                     # (hidden, d_in)
        wq=wq_t.T.astype(bf16), wk=wk_t.T.astype(bf16), wv=wv_t.T.astype(bf16),
        bq=in_proj_b[:d_in].reshape(1, d_in),
        bk=in_proj_b[d_in:2 * d_in].reshape(1, d_in),
        bv=in_proj_b[2 * d_in:].reshape(1, d_in),
        wo=wo_torch.T.astype(bf16), bo=bo,
    )


def reference_forward(x, params, *, k, num_heads):
    """Plain-JAX reference mirroring the torch forward (eval mode) with the same
    bf16-operand / f32-accumulation matmul numerics as the kernel."""
    B, d_in = x.shape
    dh = d_in // num_heads
    f32, bf16 = jnp.float32, jnp.bfloat16

    def mm(a, w):
        return jnp.dot(a.astype(bf16), w, preferred_element_type=f32)

    sae_in = x - params["b_dec"]
    pre = jax.nn.relu(mm(sae_in, params["w_enc"]) + params["b_enc"])
    vals, idx = lax.top_k(pre, k)
    z = jnp.zeros_like(pre).at[jnp.arange(B)[:, None], idx].set(vals)
    x_rec0 = mm(z, params["w_dec"]) + params["b_dec"]
    comb = jnp.stack([x, x_rec0], axis=1)                      # (B, 2, d_in)
    q = jnp.einsum("btd,de->bte", comb.astype(bf16), params["wq"],
                   preferred_element_type=f32) + params["bq"]
    kk = jnp.einsum("btd,de->bte", comb.astype(bf16), params["wk"],
                    preferred_element_type=f32) + params["bk"]
    v = jnp.einsum("btd,de->bte", comb.astype(bf16), params["wv"],
                   preferred_element_type=f32) + params["bv"]
    qh = q.reshape(B, 2, num_heads, dh).transpose(0, 2, 1, 3)
    kh = kk.reshape(B, 2, num_heads, dh).transpose(0, 2, 1, 3)
    vh = v.reshape(B, 2, num_heads, dh).transpose(0, 2, 1, 3)
    s = jnp.einsum("bhqd,bhkd->bhqk", qh, kh,
                   preferred_element_type=f32) / jnp.sqrt(jnp.float32(dh))
    p = jax.nn.softmax(s, axis=-1)
    o = jnp.einsum("bhqk,bhkd->bhqd", p, vh)
    o = o.transpose(0, 2, 1, 3).reshape(B, 2, d_in)
    out = jnp.einsum("btd,de->bte", o.astype(bf16), params["wo"],
                     preferred_element_type=f32) + params["bo"]
    return out[:, 1]


if __name__ == "__main__":
    # Small model dims consistent with the module (d_in=32, scale=4 -> hidden=128,
    # k=8, 4 heads); batch 512 so the 128-row batch tile gives a multi-step grid.
    B, D_IN, SCALE, K, HEADS = 512, 32, 4, 8, 4
    key = jax.random.PRNGKey(0)
    kx, kp = jax.random.split(key)
    x = jax.random.normal(kx, (B, D_IN), jnp.float32)
    params = init_params(kp, D_IN, SCALE)

    out = sae_attention_forward(x, params, k=K, num_heads=HEADS, tb=128)
    out = jax.block_until_ready(out)

    # Side attribute the torch module stores (not returned) — computed as JAX glue.
    e = out - x
    total_variance = jnp.sum((x - jnp.mean(x, axis=0)) ** 2)
    fvu = jnp.sum(e ** 2) / total_variance
    jax.block_until_ready(fvu)

    ref = reference_forward(x, params, k=K, num_heads=HEADS)
    assert out.shape == (B, D_IN) and out.dtype == jnp.float32
    max_err = float(jnp.max(jnp.abs(out - ref)))
    assert jnp.allclose(out, ref, atol=2e-2, rtol=2e-2), f"kernel mismatch: {max_err}"
    print("KERNEL_OK")
</pallas_src>

<mosaic_0001>
module attributes {stable_mosaic.version = 11 : i64} {
  func.func @sae_attention_kernel(%arg0: i32, %arg1: memref<128x32xf32, #tpu.memory_space<vmem>>, %arg2: memref<32x128xbf16, #tpu.memory_space<vmem>>, %arg3: memref<1x128xf32, #tpu.memory_space<vmem>>, %arg4: memref<1x32xf32, #tpu.memory_space<vmem>>, %arg5: memref<128x32xbf16, #tpu.memory_space<vmem>>, %arg6: memref<32x32xbf16, #tpu.memory_space<vmem>>, %arg7: memref<32x32xbf16, #tpu.memory_space<vmem>>, %arg8: memref<32x32xbf16, #tpu.memory_space<vmem>>, %arg9: memref<1x32xf32, #tpu.memory_space<vmem>>, %arg10: memref<1x32xf32, #tpu.memory_space<vmem>>, %arg11: memref<1x32xf32, #tpu.memory_space<vmem>>, %arg12: memref<32x32xbf16, #tpu.memory_space<vmem>>, %arg13: memref<1x32xf32, #tpu.memory_space<vmem>>, %arg14: memref<32x4xf32, #tpu.memory_space<vmem>>, %arg15: memref<4x32xf32, #tpu.memory_space<vmem>>, %arg16: memref<128x32xf32, #tpu.memory_space<vmem>>) attributes {dimension_semantics = [#tpu.dimension_semantics<parallel>], iteration_bounds = array<i64: 4>, scalar_prefetch = 0 : i64, scratch_operands = 0 : i64, tpu.core_type = #tpu.core_type<tc>, window_params = [{transform_indices = @transform_0, window_bounds = array<i64: 128, 32>}, {pipeline_mode = #tpu.pipeline_mode<synchronous>, transform_indices = @transform_1, window_bounds = array<i64: 32, 128>}, {pipeline_mode = #tpu.pipeline_mode<synchronous>, transform_indices = @transform_2, window_bounds = array<i64: 1, 128>}, {pipeline_mode = #tpu.pipeline_mode<synchronous>, transform_indices = @transform_3, window_bounds = array<i64: 1, 32>}, {pipeline_mode = #tpu.pipeline_mode<synchronous>, transform_indices = @transform_4, window_bounds = array<i64: 128, 32>}, {pipeline_mode = #tpu.pipeline_mode<synchronous>, transform_indices = @transform_5, window_bounds = array<i64: 32, 32>}, {pipeline_mode = #tpu.pipeline_mode<synchronous>, transform_indices = @transform_6, window_bounds = array<i64: 32, 32>}, {pipeline_mode = #tpu.pipeline_mode<synchronous>, transform_indices = @transform_7, window_bounds = array<i64: 32, 32>}, {pipeline_mode = #tpu.pipeline_mode<synchronous>, transform_indices = @transform_8, window_bounds = array<i64: 1, 32>}, {pipeline_mode = #tpu.pipeline_mode<synchronous>, transform_indices = @transform_9, window_bounds = array<i64: 1, 32>}, {pipeline_mode = #tpu.pipeline_mode<synchronous>, transform_indices = @transform_10, window_bounds = array<i64: 1, 32>}, {pipeline_mode = #tpu.pipeline_mode<synchronous>, transform_indices = @transform_11, window_bounds = array<i64: 32, 32>}, {pipeline_mode = #tpu.pipeline_mode<synchronous>, transform_indices = @transform_12, window_bounds = array<i64: 1, 32>}, {pipeline_mode = #tpu.pipeline_mode<synchronous>, transform_indices = @transform_13, window_bounds = array<i64: 32, 4>}, {pipeline_mode = #tpu.pipeline_mode<synchronous>, transform_indices = @transform_14, window_bounds = array<i64: 4, 32>}, {transform_indices = @transform_15, window_bounds = array<i64: 128, 32>}]} {
    %c0 = arith.constant 0 : index
    %c0_0 = arith.constant 0 : index
    %0 = vector.load %arg1[%c0, %c0_0] : memref<128x32xf32, #tpu.memory_space<vmem>>, vector<128x32xf32>
    %c0_1 = arith.constant 0 : index
    %c0_2 = arith.constant 0 : index
    %1 = vector.load %arg4[%c0_1, %c0_2] : memref<1x32xf32, #tpu.memory_space<vmem>>, vector<1x32xf32>
    %2 = vector.broadcast %1 : vector<1x32xf32> to vector<128x32xf32>
    %3 = arith.subf %0, %2 : vector<128x32xf32>
    %4 = arith.truncf %3 : vector<128x32xf32> to vector<128x32xbf16>
    %c0_3 = arith.constant 0 : index
    %c0_4 = arith.constant 0 : index
    %5 = vector.load %arg2[%c0_3, %c0_4] : memref<32x128xbf16, #tpu.memory_space<vmem>>, vector<32x128xbf16>
    %cst = arith.constant dense<0.000000e+00> : vector<128x128xf32>
    %6 = tpu.matmul %4, %5, %cst {dimension_numbers = #tpu.dot_dimension_numbers<[1], [0], [0], [1], [0, 0, 1, 1], [], []>} : vector<128x32xbf16>, vector<32x128xbf16>, vector<128x128xf32> -> vector<128x128xf32>
    %c0_5 = arith.constant 0 : index
    %c0_6 = arith.constant 0 : index
    %7 = vector.load %arg3[%c0_5, %c0_6] : memref<1x128xf32, #tpu.memory_space<vmem>>, vector<1x128xf32>
    %8 = vector.broadcast %7 : vector<1x128xf32> to vector<128x128xf32>
    %9 = arith.addf %6, %8 : vector<128x128xf32>
    %cst_7 = arith.constant 0.000000e+00 : f32
    %10 = vector.broadcast %cst_7 : f32 to vector<128x128xf32>
    %11 = arith.maximumf %9, %10 : vector<128x128xf32>
    %cst_8 = arith.constant 0.000000e+00 : f32
    %12 = vector.broadcast %cst_8 : f32 to vector<128x1xf32>
    %c0_i32 = arith.constant 0 : i32
    %cst_9 = arith.constant dense<0xFF800000> : vector<128xf32>
    %13 = vector.multi_reduction <maximumf>, %11, %cst_9 [1] : vector<128x128xf32> to vector<128xf32>
    %14 = vector.shape_cast %13 : vector<128xf32> to vector<128x1xf32>
    %15 = vector.broadcast %14 : vector<128x1xf32> to vector<128x128xf32>
    %16 = arith.cmpf oge, %11, %15 : vector<128x128xf32>
    %cst_10 = arith.constant -1.000000e+30 : f32
    %17 = vector.broadcast %cst_10 : f32 to vector<128x128xf32>
    %18 = arith.select %16, %17, %11 : vector<128x128xi1>, vector<128x128xf32>
    %c1_i32 = arith.constant 1 : i32
    %cst_11 = arith.constant dense<0xFF800000> : vector<128xf32>
    %19 = vector.multi_reduction <maximumf>, %18, %cst_11 [1] : vector<128x128xf32> to vector<128xf32>
    %20 = vector.shape_cast %19 : vector<128xf32> to vector<128x1xf32>
    %21 = vector.broadcast %20 : vector<128x1xf32> to vector<128x128xf32>
    %22 = arith.cmpf oge, %18, %21 : vector<128x128xf32>
    %cst_12 = arith.constant -1.000000e+30 : f32
    %23 = vector.broadcast %cst_12 : f32 to vector<128x128xf32>
    %24 = arith.select %22, %23, %18 : vector<128x128xi1>, vector<128x128xf32>
    %c2_i32 = arith.constant 2 : i32
    %cst_13 = arith.constant dense<0xFF800000> : vector<128xf32>
    %25 = vector.multi_reduction <maximumf>, %24, %cst_13 [1] : vector<128x128xf32> to vector<128xf32>
    %26 = vector.shape_cast %25 : vector<128xf32> to vector<128x1xf32>
    %27 = vector.broadcast %26 : vector<128x1xf32> to vector<128x128xf32>
    %28 = arith.cmpf oge, %24, %27 : vector<128x128xf32>
    %cst_14 = arith.constant -1.000000e+30 : f32
    %29 = vector.broadcast %cst_14 : f32 to vector<128x128xf32>
    %30 = arith.select %28, %29, %24 : vector<128x128xi1>, vector<128x128xf32>
    %c3_i32 = arith.constant 3 : i32
    %cst_15 = arith.constant dense<0xFF800000> : vector<128xf32>
    %31 = vector.multi_reduction <maximumf>, %30, %cst_15 [1] : vector<128x128xf32> to vector<128xf32>
    %32 = vector.shape_cast %31 : vector<128xf32> to vector<128x1xf32>
    %33 = vector.broadcast %32 : vector<128x1xf32> to vector<128x128xf32>
    %34 = arith.cmpf oge, %30, %33 : vector<128x128xf32>
    %cst_16 = arith.constant -1.000000e+30 : f32
    %35 = vector.broadcast %cst_16 : f32 to vector<128x128xf32>
    %36 = arith.select %34, %35, %30 : vector<128x128xi1>, vector<128x128xf32>
    %c4_i32 = arith.constant 4 : i32
    %cst_17 = arith.constant dense<0xFF800000> : vector<128xf32>
    %37 = vector.multi_reduction <maximumf>, %36, %cst_17 [1] : vector<128x128xf32> to vector<128xf32>
    %38 = vector.shape_cast %37 : vector<128xf32> to vector<128x1xf32>
    %39 = vector.broadcast %38 : vector<128x1xf32> to vector<128x128xf32>
    %40 = arith.cmpf oge, %36, %39 : vector<128x128xf32>
    %cst_18 = arith.constant -1.000000e+30 : f32
    %41 = vector.broadcast %cst_18 : f32 to vector<128x128xf32>
    %42 = arith.select %40, %41, %36 : vector<128x128xi1>, vector<128x128xf32>
    %c5_i32 = arith.constant 5 : i32
    %cst_19 = arith.constant dense<0xFF800000> : vector<128xf32>
    %43 = vector.multi_reduction <maximumf>, %42, %cst_19 [1] : vector<128x128xf32> to vector<128xf32>
    %44 = vector.shape_cast %43 : vector<128xf32> to vector<128x1xf32>
    %45 = vector.broadcast %44 : vector<128x1xf32> to vector<128x128xf32>
    %46 = arith.cmpf oge, %42, %45 : vector<128x128xf32>
    %cst_20 = arith.constant -1.000000e+30 : f32
    %47 = vector.broadcast %cst_20 : f32 to vector<128x128xf32>
    %48 = arith.select %46, %47, %42 : vector<128x128xi1>, vector<128x128xf32>
    %c6_i32 = arith.constant 6 : i32
    %cst_21 = arith.constant dense<0xFF800000> : vector<128xf32>
    %49 = vector.multi_reduction <maximumf>, %48, %cst_21 [1] : vector<128x128xf32> to vector<128xf32>
    %50 = vector.shape_cast %49 : vector<128xf32> to vector<128x1xf32>
    %51 = vector.broadcast %50 : vector<128x1xf32> to vector<128x128xf32>
    %52 = arith.cmpf oge, %48, %51 : vector<128x128xf32>
    %cst_22 = arith.constant -1.000000e+30 : f32
    %53 = vector.broadcast %cst_22 : f32 to vector<128x128xf32>
    %54 = arith.select %52, %53, %48 : vector<128x128xi1>, vector<128x128xf32>
    %c7_i32 = arith.constant 7 : i32
    %cst_23 = arith.constant dense<0xFF800000> : vector<128xf32>
    %55 = vector.multi_reduction <maximumf>, %54, %cst_23 [1] : vector<128x128xf32> to vector<128xf32>
    %56 = vector.shape_cast %55 : vector<128xf32> to vector<128x1xf32>
    %57 = vector.broadcast %56 : vector<128x1xf32> to vector<128x128xf32>
    %58 = arith.cmpf oge, %54, %57 : vector<128x128xf32>
    %cst_24 = arith.constant -1.000000e+30 : f32
    %59 = vector.broadcast %cst_24 : f32 to vector<128x128xf32>
    %60 = arith.select %58, %59, %54 : vector<128x128xi1>, vector<128x128xf32>
    %61 = vector.broadcast %56 : vector<128x1xf32> to vector<128x128xf32>
    %62 = arith.cmpf oge, %11, %61 : vector<128x128xf32>
    %cst_25 = arith.constant 0.000000e+00 : f32
    %63 = vector.broadcast %cst_25 : f32 to vector<128x128xf32>
    %64 = arith.select %62, %11, %63 : vector<128x128xi1>, vector<128x128xf32>
    %65 = arith.truncf %64 : vector<128x128xf32> to vector<128x128xbf16>
    %c0_26 = arith.constant 0 : index
    %c0_27 = arith.constant 0 : index
    %66 = vector.load %arg5[%c0_26, %c0_27] : memref<128x32xbf16, #tpu.memory_space<vmem>>, vector<128x32xbf16>
    %cst_28 = arith.constant dense<0.000000e+00> : vector<128x32xf32>
    %67 = tpu.matmul %65, %66, %cst_28 {dimension_numbers = #tpu.dot_dimension_numbers<[1], [0], [0], [1], [0, 0, 1, 1], [], []>} : vector<128x128xbf16>, vector<128x32xbf16>, vector<128x32xf32> -> vector<128x32xf32>
    %68 = vector.broadcast %1 : vector<1x32xf32> to vector<128x32xf32>
    %69 = arith.addf %67, %68 : vector<128x32xf32>
    %70 = tpu.concatenate %0, %69 in 0 : vector<128x32xf32>, vector<128x32xf32> -> vector<256x32xf32>
    %71 = arith.truncf %70 : vector<256x32xf32> to vector<256x32xbf16>
    %c0_29 = arith.constant 0 : index
    %c0_30 = arith.constant 0 : index
    %72 = vector.load %arg7[%c0_29, %c0_30] : memref<32x32xbf16, #tpu.memory_space<vmem>>, vector<32x32xbf16>
    %cst_31 = arith.constant dense<0.000000e+00> : vector<256x32xf32>
    %73 = tpu.matmul %71, %72, %cst_31 {dimension_numbers = #tpu.dot_dimension_numbers<[1], [0], [0], [1], [0, 0, 1, 1], [], []>} : vector<256x32xbf16>, vector<32x32xbf16>, vector<256x32xf32> -> vector<256x32xf32>
    %c0_32 = arith.constant 0 : index
    %c0_33 = arith.constant 0 : index
    %74 = vector.load %arg10[%c0_32, %c0_33] : memref<1x32xf32, #tpu.memory_space<vmem>>, vector<1x32xf32>
    %75 = vector.broadcast %74 : vector<1x32xf32> to vector<256x32xf32>
    %76 = arith.addf %73, %75 : vector<256x32xf32>
    %c0_34 = arith.constant 0 : index
    %c0_35 = arith.constant 0 : index
    %77 = vector.load %arg8[%c0_34, %c0_35] : memref<32x32xbf16, #tpu.memory_space<vmem>>, vector<32x32xbf16>
    %cst_36 = arith.constant dense<0.000000e+00> : vector<256x32xf32>
    %78 = tpu.matmul %71, %77, %cst_36 {dimension_numbers = #tpu.dot_dimension_numbers<[1], [0], [0], [1], [0, 0, 1, 1], [], []>} : vector<256x32xbf16>, vector<32x32xbf16>, vector<256x32xf32> -> vector<256x32xf32>
    %c0_37 = arith.constant 0 : index
    %c0_38 = arith.constant 0 : index
    %79 = vector.load %arg11[%c0_37, %c0_38] : memref<1x32xf32, #tpu.memory_space<vmem>>, vector<1x32xf32>
    %80 = vector.broadcast %79 : vector<1x32xf32> to vector<256x32xf32>
    %81 = arith.addf %78, %80 : vector<256x32xf32>
    %82 = arith.truncf %69 : vector<128x32xf32> to vector<128x32xbf16>
    %c0_39 = arith.constant 0 : index
    %c0_40 = arith.constant 0 : index
    %83 = vector.load %arg6[%c0_39, %c0_40] : memref<32x32xbf16, #tpu.memory_space<vmem>>, vector<32x32xbf16>
    %cst_41 = arith.constant dense<0.000000e+00> : vector<128x32xf32>
    %84 = tpu.matmul %82, %83, %cst_41 {dimension_numbers = #tpu.dot_dimension_numbers<[1], [0], [0], [1], [0, 0, 1, 1], [], []>} : vector<128x32xbf16>, vector<32x32xbf16>, vector<128x32xf32> -> vector<128x32xf32>
    %c0_42 = arith.constant 0 : index
    %c0_43 = arith.constant 0 : index
    %85 = vector.load %arg9[%c0_42, %c0_43] : memref<1x32xf32, #tpu.memory_space<vmem>>, vector<1x32xf32>
    %86 = vector.broadcast %85 : vector<1x32xf32> to vector<128x32xf32>
    %87 = arith.addf %84, %86 : vector<128x32xf32>
    %88 = vector.extract_strided_slice %76 {offsets = [0, 0], sizes = [128, 32], strides = [1, 1]} : vector<256x32xf32> to vector<128x32xf32>
    %89 = vector.extract_strided_slice %76 {offsets = [128, 0], sizes = [128, 32], strides = [1, 1]} : vector<256x32xf32> to vector<128x32xf32>
    %90 = vector.extract_strided_slice %81 {offsets = [0, 0], sizes = [128, 32], strides = [1, 1]} : vector<256x32xf32> to vector<128x32xf32>
    %91 = vector.extract_strided_slice %81 {offsets = [128, 0], sizes = [128, 32], strides = [1, 1]} : vector<256x32xf32> to vector<128x32xf32>
    %c0_44 = arith.constant 0 : index
    %c0_45 = arith.constant 0 : index
    %92 = vector.load %arg14[%c0_44, %c0_45] : memref<32x4xf32, #tpu.memory_space<vmem>>, vector<32x4xf32>
    %93 = arith.mulf %87, %88 : vector<128x32xf32>
    %cst_46 = arith.constant dense<0.000000e+00> : vector<128x4xf32>
    %94 = tpu.matmul %93, %92, %cst_46 {dimension_numbers = #tpu.dot_dimension_numbers<[1], [0], [0], [1], [0, 0, 1, 1], [], []>} : vector<128x32xf32>, vector<32x4xf32>, vector<128x4xf32> -> vector<128x4xf32>
    %95 = arith.mulf %87, %89 : vector<128x32xf32>
    %cst_47 = arith.constant dense<0.000000e+00> : vector<128x4xf32>
    %96 = tpu.matmul %95, %92, %cst_47 {dimension_numbers = #tpu.dot_dimension_numbers<[1], [0], [0], [1], [0, 0, 1, 1], [], []>} : vector<128x32xf32>, vector<32x4xf32>, vector<128x4xf32> -> vector<128x4xf32>
    %97 = arith.maximumf %94, %96 : vector<128x4xf32>
    %98 = arith.subf %94, %97 : vector<128x4xf32>
    %99 = math.exp %98 : vector<128x4xf32>
    %100 = arith.subf %96, %97 : vector<128x4xf32>
    %101 = math.exp %100 : vector<128x4xf32>
    %102 = arith.addf %99, %101 : vector<128x4xf32>
    %103 = tpu.reciprocal %102 {approx = true} : vector<128x4xf32> -> vector<128x4xf32>
    %104 = arith.mulf %99, %103 : vector<128x4xf32>
    %c0_48 = arith.constant 0 : index
    %c0_49 = arith.constant 0 : index
    %105 = vector.load %arg15[%c0_48, %c0_49] : memref<4x32xf32, #tpu.memory_space<vmem>>, vector<4x32xf32>
    %cst_50 = arith.constant dense<0.000000e+00> : vector<128x32xf32>
    %106 = tpu.matmul %104, %105, %cst_50 {dimension_numbers = #tpu.dot_dimension_numbers<[1], [0], [0], [1], [0, 0, 1, 1], [], []>} : vector<128x4xf32>, vector<4x32xf32>, vector<128x32xf32> -> vector<128x32xf32>
    %107 = arith.subf %90, %91 : vector<128x32xf32>
    %108 = arith.mulf %106, %107 : vector<128x32xf32>
    %109 = arith.addf %91, %108 : vector<128x32xf32>
    %110 = arith.truncf %109 : vector<128x32xf32> to vector<128x32xbf16>
    %c0_51 = arith.constant 0 : index
    %c0_52 = arith.constant 0 : index
    %111 = vector.load %arg12[%c0_51, %c0_52] : memref<32x32xbf16, #tpu.memory_space<vmem>>, vector<32x32xbf16>
    %cst_53 = arith.constant dense<0.000000e+00> : vector<128x32xf32>
    %112 = tpu.matmul %110, %111, %cst_53 {dimension_numbers = #tpu.dot_dimension_numbers<[1], [0], [0], [1], [0, 0, 1, 1], [], []>} : vector<128x32xbf16>, vector<32x32xbf16>, vector<128x32xf32> -> vector<128x32xf32>
    %c0_54 = arith.constant 0 : index
    %c0_55 = arith.constant 0 : index
    %113 = vector.load %arg13[%c0_54, %c0_55] : memref<1x32xf32, #tpu.memory_space<vmem>>, vector<1x32xf32>
    %114 = vector.broadcast %113 : vector<1x32xf32> to vector<128x32xf32>
    %115 = arith.addf %112, %114 : vector<128x32xf32>
    %c0_56 = arith.constant 0 : index
    %c0_57 = arith.constant 0 : index
    %116 = vector.load %arg16[%c0_56, %c0_57] : memref<128x32xf32, #tpu.memory_space<vmem>>, vector<128x32xf32>
    tpu.vector_store %arg16[%c0_56, %c0_57], %115 {strides = array<i32>} : memref<128x32xf32, #tpu.memory_space<vmem>>, vector<128x32xf32>,
    return
  }
  func.func @transform_0(%arg0: i32) -> (i32, i32) {
    %c0_i32 = arith.constant 0 : i32
    %c0_i32_0 = arith.constant 0 : i32
    return %arg0, %c0_i32 : i32, i32
  }
  func.func @transform_1(%arg0: i32) -> (i32, i32) {
    %c0_i32 = arith.constant 0 : i32
    %c0_i32_0 = arith.constant 0 : i32
    %c0_i32_1 = arith.constant 0 : i32
    return %c0_i32, %c0_i32_0 : i32, i32
  }
  func.func @transform_2(%arg0: i32) -> (i32, i32) {
    %c0_i32 = arith.constant 0 : i32
    %c0_i32_0 = arith.constant 0 : i32
    %c0_i32_1 = arith.constant 0 : i32
    return %c0_i32, %c0_i32_0 : i32, i32
  }
  func.func @transform_3(%arg0: i32) -> (i32, i32) {
    %c0_i32 = arith.constant 0 : i32
    %c0_i32_0 = arith.constant 0 : i32
    %c0_i32_1 = arith.constant 0 : i32
    return %c0_i32, %c0_i32_0 : i32, i32
  }
  func.func @transform_4(%arg0: i32) -> (i32, i32) {
    %c0_i32 = arith.constant 0 : i32
    %c0_i32_0 = arith.constant 0 : i32
    %c0_i32_1 = arith.constant 0 : i32
    return %c0_i32, %c0_i32_0 : i32, i32
  }
  func.func @transform_5(%arg0: i32) -> (i32, i32) {
    %c0_i32 = arith.constant 0 : i32
    %c0_i32_0 = arith.constant 0 : i32
    %c0_i32_1 = arith.constant 0 : i32
    return %c0_i32, %c0_i32_0 : i32, i32
  }
  func.func @transform_6(%arg0: i32) -> (i32, i32) {
    %c0_i32 = arith.constant 0 : i32
    %c0_i32_0 = arith.constant 0 : i32
    %c0_i32_1 = arith.constant 0 : i32
    return %c0_i32, %c0_i32_0 : i32, i32
  }
  func.func @transform_7(%arg0: i32) -> (i32, i32) {
    %c0_i32 = arith.constant 0 : i32
    %c0_i32_0 = arith.constant 0 : i32
    %c0_i32_1 = arith.constant 0 : i32
    return %c0_i32, %c0_i32_0 : i32, i32
  }
  func.func @transform_8(%arg0: i32) -> (i32, i32) {
    %c0_i32 = arith.constant 0 : i32
    %c0_i32_0 = arith.constant 0 : i32
    %c0_i32_1 = arith.constant 0 : i32
    return %c0_i32, %c0_i32_0 : i32, i32
  }
  func.func @transform_9(%arg0: i32) -> (i32, i32) {
    %c0_i32 = arith.constant 0 : i32
    %c0_i32_0 = arith.constant 0 : i32
    %c0_i32_1 = arith.constant 0 : i32
    return %c0_i32, %c0_i32_0 : i32, i32
  }
  func.func @transform_10(%arg0: i32) -> (i32, i32) {
    %c0_i32 = arith.constant 0 : i32
    %c0_i32_0 = arith.constant 0 : i32
    %c0_i32_1 = arith.constant 0 : i32
    return %c0_i32, %c0_i32_0 : i32, i32
  }
  func.func @transform_11(%arg0: i32) -> (i32, i32) {
    %c0_i32 = arith.constant 0 : i32
    %c0_i32_0 = arith.constant 0 : i32
    %c0_i32_1 = arith.constant 0 : i32
    return %c0_i32, %c0_i32_0 : i32, i32
  }
  func.func @transform_12(%arg0: i32) -> (i32, i32) {
    %c0_i32 = arith.constant 0 : i32
    %c0_i32_0 = arith.constant 0 : i32
    %c0_i32_1 = arith.constant 0 : i32
    return %c0_i32, %c0_i32_0 : i32, i32
  }
  func.func @transform_13(%arg0: i32) -> (i32, i32) {
    %c0_i32 = arith.constant 0 : i32
    %c0_i32_0 = arith.constant 0 : i32
    %c0_i32_1 = arith.constant 0 : i32
    return %c0_i32, %c0_i32_0 : i32, i32
  }
  func.func @transform_14(%arg0: i32) -> (i32, i32) {
    %c0_i32 = arith.constant 0 : i32
    %c0_i32_0 = arith.constant 0 : i32
    %c0_i32_1 = arith.constant 0 : i32
    return %c0_i32, %c0_i32_0 : i32, i32
  }
  func.func @transform_15(%arg0: i32) -> (i32, i32) {
    %c0_i32 = arith.constant 0 : i32
    %c0_i32_0 = arith.constant 0 : i32
    return %arg0, %c0_i32 : i32, i32
  }
}

</mosaic_0001>

<llo_original>
// kernel: tpu_custom_call.1
$region0: #{tpu_custom_call.1}
  #allocation0 [shape = 'u32[]', space=smem, size = 0x4, offset = 0x4, fixed_abs, tag = 'smem constant byte address 0x4 - core index']
  #allocation1 [shape = 'u32[72,128]{1,0:T(1,128)}', space=vmem, size = 0x9000, scoped, tag = 'internal scratch']
  %s0 = inlined_call_operand.vmem [shape: f32[512,32], index: 0, kind: input, shape index: {}]
  %s1 = inlined_call_operand.vmem [shape: bf16[32,128], index: 1, kind: input, shape index: {}]
  %s2 = inlined_call_operand.vmem [shape: f32[1,128], index: 2, kind: input, shape index: {}]
  %s3 = inlined_call_operand.vmem [shape: f32[1,32], index: 3, kind: input, shape index: {}]
  %s4 = inlined_call_operand.vmem [shape: bf16[128,32], index: 4, kind: input, shape index: {}]
  %s5 = inlined_call_operand.vmem [shape: bf16[32,32], index: 5, kind: input, shape index: {}]
  %s6 = inlined_call_operand.vmem [shape: bf16[32,32], index: 6, kind: input, shape index: {}]
  %s7 = inlined_call_operand.vmem [shape: bf16[32,32], index: 7, kind: input, shape index: {}]
  %s8 = inlined_call_operand.vmem [shape: f32[1,32], index: 8, kind: input, shape index: {}]
  %s9 = inlined_call_operand.vmem [shape: f32[1,32], index: 9, kind: input, shape index: {}]
  %s10 = inlined_call_operand.vmem [shape: f32[1,32], index: 10, kind: input, shape index: {}]
  %s11 = inlined_call_operand.vmem [shape: bf16[32,32], index: 11, kind: input, shape index: {}]
  %s12 = inlined_call_operand.vmem [shape: f32[1,32], index: 12, kind: input, shape index: {}]
  %s13 = inlined_call_operand.vmem [shape: f32[32,4], index: 13, kind: input, shape index: {}]
  %s14 = inlined_call_operand.vmem [shape: f32[4,32], index: 14, kind: input, shape index: {}]
  %s15 = inlined_call_operand.vmem [shape: f32[512,32], index: 15, kind: output, shape index: {}]
  %s16 = sld [smem:[#allocation0]]
  $region93: #{tpu_custom_call.1} parent=0
    _
  %s18 = ssub.s32 1, %s16
  %s19 = scalar_select 0, %s18, %s16
  loop: start=0, step=1, limit=6
  $region2: #{tpu_custom_call.1} parent=0 // loop_pre_header
    _
  $region3: #{tpu_custom_call.1} parent=0 // loop_header
    %s21 = sphi 0, %s25
    %p22 = scmp.ge.s32.totalorder %s21, 6
    %s31 = sphi 0, %s33
    %s34 = sphi 0, %s31
    %s35 = sphi 0, %s34
    %s51 = sphi 0, %s35
    %s55 = sphi 0, %s55
    %s57 = sphi 0, %s55
    %s58 = sphi 0, %s57
    %s72 = sphi 0, %s58
    %s76 = sphi 0, %s76
    %s78 = sphi 0, %s76
    %s79 = sphi 0, %s78
    %s93 = sphi 0, %s79
    %s97 = sphi 0, %s97
    %s99 = sphi 0, %s97
    %s100 = sphi 0, %s99
    %s114 = sphi 0, %s100
    %s118 = sphi 0, %s118
    %s120 = sphi 0, %s118
    %s121 = sphi 0, %s120
    %s135 = sphi 0, %s121
    %s139 = sphi 0, %s139
    %s141 = sphi 0, %s139
    %s142 = sphi 0, %s141
    %s156 = sphi 0, %s142
    %s160 = sphi 0, %s160
    %s162 = sphi 0, %s160
    %s163 = sphi 0, %s162
    %s177 = sphi 0, %s163
    %s181 = sphi 0, %s181
    %s183 = sphi 0, %s181
    %s184 = sphi 0, %s183
    %s198 = sphi 0, %s184
    %s202 = sphi 0, %s202
    %s204 = sphi 0, %s202
    %s205 = sphi 0, %s204
    %s219 = sphi 0, %s205
    %s223 = sphi 0, %s223
    %s225 = sphi 0, %s223
    %s226 = sphi 0, %s225
    %s240 = sphi 0, %s226
    %s244 = sphi 0, %s244
    %s246 = sphi 0, %s244
    %s247 = sphi 0, %s246
    %s261 = sphi 0, %s247
    %s265 = sphi 0, %s265
    %s267 = sphi 0, %s265
    %s268 = sphi 0, %s267
    %s282 = sphi 0, %s268
    %s286 = sphi 0, %s286
    %s288 = sphi 0, %s286
    %s289 = sphi 0, %s288
    %s303 = sphi 0, %s289
    %s307 = sphi 0, %s307
    %s309 = sphi 0, %s307
    %s310 = sphi 0, %s309
    %s324 = sphi 0, %s310
    %s328 = sphi 0, %s328
    %s330 = sphi 0, %s328
    %s331 = sphi 0, %s330
    %s345 = sphi 0, %s331
    %s351 = sphi 0, %s353
    %s354 = sphi 0, %s351
    %s355 = sphi 0, %s354
    %s371 = sphi 0, %s355
  $region4: #{tpu_custom_call.1} parent=0 // loop_header_branch
    %24 = sbr.rel (%p22) target = $region8
  $region5: #{tpu_custom_call.1} parent=0 // loop_body
    %s26 = ssub.s32 %s21, 1
    %s27 = ssub.s32 %s21, 2
    %s28 = sadd.s32 %s21, 1
    %s29 = ssub.s32 %s21, %s28
    %p30 = scmp.eq.s32.totalorder %s29, 0
    %s32 = sadd.s32 %s31, 1
    %s33 = scalar_select %p30, %s31, %s32
    %p36 = pneg %p30
    %p37 = scmp.eq.s32.totalorder %s21, 3
    %p38 = por %p36, %p37
    %p39 = scmp.ne.s32.totalorder %s31, %s34
    %p40 = scmp.eq.s32.totalorder %s21, 0
    %p41 = por %p39, %p40
    %p42 = scmp.ne.s32.totalorder %s31, %s34
    %p43 = scmp.eq.s32.totalorder %s26, 3
    %p44 = por %p42, %p43
    %p45 = scmp.ne.s32.totalorder %s34, %s35
    %p46 = scmp.eq.s32.totalorder %s26, 0
    %p47 = por %p45, %p46
    %p48 = scmp.ne.s32.totalorder %s34, %s35
    %p49 = scmp.eq.s32.totalorder %s27, 3
    %p50 = por %p48, %p49
    %p52 = scmp.ne.s32.totalorder %s35, %s51
    %p53 = scmp.eq.s32.totalorder %s27, 0
    %p54 = por %p52, %p53
    %s56 = sadd.s32 %s55, 1
    %p59 = scmp.eq.s32.totalorder %s21, 3
    %p60 = scmp.ne.s32.totalorder %s55, %s57
    %p61 = scmp.eq.s32.totalorder %s21, 0
    %p62 = por %p60, %p61
    %p63 = scmp.ne.s32.totalorder %s55, %s57
    %p64 = scmp.eq.s32.totalorder %s26, 3
    %p65 = por %p63, %p64
    %p66 = scmp.ne.s32.totalorder %s57, %s58
    %p67 = scmp.eq.s32.totalorder %s26, 0
    %p68 = por %p66, %p67
    %p69 = scmp.ne.s32.totalorder %s57, %s58
    %p70 = scmp.eq.s32.totalorder %s27, 3
    %p71 = por %p69, %p70
    %p73 = scmp.ne.s32.totalorder %s58, %s72
    %p74 = scmp.eq.s32.totalorder %s27, 0
    %p75 = por %p73, %p74
    %s77 = sadd.s32 %s76, 1
    %p80 = scmp.eq.s32.totalorder %s21, 3
    %p81 = scmp.ne.s32.totalorder %s76, %s78
    %p82 = scmp.eq.s32.totalorder %s21, 0
    %p83 = por %p81, %p82
    %p84 = scmp.ne.s32.totalorder %s76, %s78
    %p85 = scmp.eq.s32.totalorder %s26, 3
    %p86 = por %p84, %p85
    %p87 = scmp.ne.s32.totalorder %s78, %s79
    %p88 = scmp.eq.s32.totalorder %s26, 0
    %p89 = por %p87, %p88
    %p90 = scmp.ne.s32.totalorder %s78, %s79
    %p91 = scmp.eq.s32.totalorder %s27, 3
    %p92 = por %p90, %p91
    %p94 = scmp.ne.s32.totalorder %s79, %s93
    %p95 = scmp.eq.s32.totalorder %s27, 0
    %p96 = por %p94, %p95
    %s98 = sadd.s32 %s97, 1
    %p101 = scmp.eq.s32.totalorder %s21, 3
    %p102 = scmp.ne.s32.totalorder %s97, %s99
    %p103 = scmp.eq.s32.totalorder %s21, 0
    %p104 = por %p102, %p103
    %p105 = scmp.ne.s32.totalorder %s97, %s99
    %p106 = scmp.eq.s32.totalorder %s26, 3
    %p107 = por %p105, %p106
    %p108 = scmp.ne.s32.totalorder %s99, %s100
    %p109 = scmp.eq.s32.totalorder %s26, 0
    %p110 = por %p108, %p109
    %p111 = scmp.ne.s32.totalorder %s99, %s100
    %p112 = scmp.eq.s32.totalorder %s27, 3
    %p113 = por %p111, %p112
    %p115 = scmp.ne.s32.totalorder %s100, %s114
    %p116 = scmp.eq.s32.totalorder %s27, 0
    %p117 = por %p115, %p116
    %s119 = sadd.s32 %s118, 1
    %p122 = scmp.eq.s32.totalorder %s21, 3
    %p123 = scmp.ne.s32.totalorder %s118, %s120
    %p124 = scmp.eq.s32.totalorder %s21, 0
    %p125 = por %p123, %p124
    %p126 = scmp.ne.s32.totalorder %s118, %s120
    %p127 = scmp.eq.s32.totalorder %s26, 3
    %p128 = por %p126, %p127
    %p129 = scmp.ne.s32.totalorder %s120, %s121
    %p130 = scmp.eq.s32.totalorder %s26, 0
    %p131 = por %p129, %p130
    %p132 = scmp.ne.s32.totalorder %s120, %s121
    %p133 = scmp.eq.s32.totalorder %s27, 3
    %p134 = por %p132, %p133
    %p136 = scmp.ne.s32.totalorder %s121, %s135
    %p137 = scmp.eq.s32.totalorder %s27, 0
    %p138 = por %p136, %p137
    %s140 = sadd.s32 %s139, 1
    %p143 = scmp.eq.s32.totalorder %s21, 3
    %p144 = scmp.ne.s32.totalorder %s139, %s141
    %p145 = scmp.eq.s32.totalorder %s21, 0
    %p146 = por %p144, %p145
    %p147 = scmp.ne.s32.totalorder %s139, %s141
    %p148 = scmp.eq.s32.totalorder %s26, 3
    %p149 = por %p147, %p148
    %p150 = scmp.ne.s32.totalorder %s141, %s142
    %p151 = scmp.eq.s32.totalorder %s26, 0
    %p152 = por %p150, %p151
    %p153 = scmp.ne.s32.totalorder %s141, %s142
    %p154 = scmp.eq.s32.totalorder %s27, 3
    %p155 = por %p153, %p154
    %p157 = scmp.ne.s32.totalorder %s142, %s156
    %p158 = scmp.eq.s32.totalorder %s27, 0
    %p159 = por %p157, %p158
    %s161 = sadd.s32 %s160, 1
    %p164 = scmp.eq.s32.totalorder %s21, 3
    %p165 = scmp.ne.s32.totalorder %s160, %s162
    %p166 = scmp.eq.s32.totalorder %s21, 0
    %p167 = por %p165, %p166
    %p168 = scmp.ne.s32.totalorder %s160, %s162
    %p169 = scmp.eq.s32.totalorder %s26, 3
    %p170 = por %p168, %p169
    %p171 = scmp.ne.s32.totalorder %s162, %s163
    %p172 = scmp.eq.s32.totalorder %s26, 0
    %p173 = por %p171, %p172
    %p174 = scmp.ne.s32.totalorder %s162, %s163
    %p175 = scmp.eq.s32.totalorder %s27, 3
    %p176 = por %p174, %p175
    %p178 = scmp.ne.s32.totalorder %s163, %s177
    %p179 = scmp.eq.s32.totalorder %s27, 0
    %p180 = por %p178, %p179
    %s182 = sadd.s32 %s181, 1
    %p185 = scmp.eq.s32.totalorder %s21, 3
    %p186 = scmp.ne.s32.totalorder %s181, %s183
    %p187 = scmp.eq.s32.totalorder %s21, 0
    %p188 = por %p186, %p187
    %p189 = scmp.ne.s32.totalorder %s181, %s183
    %p190 = scmp.eq.s32.totalorder %s26, 3
    %p191 = por %p189, %p190
    %p192 = scmp.ne.s32.totalorder %s183, %s184
    %p193 = scmp.eq.s32.totalorder %s26, 0
    %p194 = por %p192, %p193
    %p195 = scmp.ne.s32.totalorder %s183, %s184
    %p196 = scmp.eq.s32.totalorder %s27, 3
    %p197 = por %p195, %p196
    %p199 = scmp.ne.s32.totalorder %s184, %s198
    %p200 = scmp.eq.s32.totalorder %s27, 0
    %p201 = por %p199, %p200
    %s203 = sadd.s32 %s202, 1
    %p206 = scmp.eq.s32.totalorder %s21, 3
    %p207 = scmp.ne.s32.totalorder %s202, %s204
    %p208 = scmp.eq.s32.totalorder %s21, 0
    %p209 = por %p207, %p208
    %p210 = scmp.ne.s32.totalorder %s202, %s204
    %p211 = scmp.eq.s32.totalorder %s26, 3
    %p212 = por %p210, %p211
    %p213 = scmp.ne.s32.totalorder %s204, %s205
    %p214 = scmp.eq.s32.totalorder %s26, 0
    %p215 = por %p213, %p214
    %p216 = scmp.ne.s32.totalorder %s204, %s205
    %p217 = scmp.eq.s32.totalorder %s27, 3
    %p218 = por %p216, %p217
    %p220 = scmp.ne.s32.totalorder %s205, %s219
    %p221 = scmp.eq.s32.totalorder %s27, 0
    %p222 = por %p220, %p221
    %s224 = sadd.s32 %s223, 1
    %p227 = scmp.eq.s32.totalorder %s21, 3
    %p228 = scmp.ne.s32.totalorder %s223, %s225
    %p229 = scmp.eq.s32.totalorder %s21, 0
    %p230 = por %p228, %p229
    %p231 = scmp.ne.s32.totalorder %s223, %s225
    %p232 = scmp.eq.s32.totalorder %s26, 3
    %p233 = por %p231, %p232
    %p234 = scmp.ne.s32.totalorder %s225, %s226
    %p235 = scmp.eq.s32.totalorder %s26, 0
    %p236 = por %p234, %p235
    %p237 = scmp.ne.s32.totalorder %s225, %s226
    %p238 = scmp.eq.s32.totalorder %s27, 3
    %p239 = por %p237, %p238
    %p241 = scmp.ne.s32.totalorder %s226, %s240
    %p242 = scmp.eq.s32.totalorder %s27, 0
    %p243 = por %p241, %p242
    %s245 = sadd.s32 %s244, 1
    %p248 = scmp.eq.s32.totalorder %s21, 3
    %p249 = scmp.ne.s32.totalorder %s244, %s246
    %p250 = scmp.eq.s32.totalorder %s21, 0
    %p251 = por %p249, %p250
    %p252 = scmp.ne.s32.totalorder %s244, %s246
    %p253 = scmp.eq.s32.totalorder %s26, 3
    %p254 = por %p252, %p253
    %p255 = scmp.ne.s32.totalorder %s246, %s247
    %p256 = scmp.eq.s32.totalorder %s26, 0
    %p257 = por %p255, %p256
    %p258 = scmp.ne.s32.totalorder %s246, %s247
    %p259 = scmp.eq.s32.totalorder %s27, 3
    %p260 = por %p258, %p259
    %p262 = scmp.ne.s32.totalorder %s247, %s261
    %p263 = scmp.eq.s32.totalorder %s27, 0
    %p264 = por %p262, %p263
    %s266 = sadd.s32 %s265, 1
    %p269 = scmp.eq.s32.totalorder %s21, 3
    %p270 = scmp.ne.s32.totalorder %s265, %s267
    %p271 = scmp.eq.s32.totalorder %s21, 0
    %p272 = por %p270, %p271
    %p273 = scmp.ne.s32.totalorder %s265, %s267
    %p274 = scmp.eq.s32.totalorder %s26, 3
    %p275 = por %p273, %p274
    %p276 = scmp.ne.s32.totalorder %s267, %s268
    %p277 = scmp.eq.s32.totalorder %s26, 0
    %p278 = por %p276, %p277
    %p279 = scmp.ne.s32.totalorder %s267, %s268
    %p280 = scmp.eq.s32.totalorder %s27, 3
    %p281 = por %p279, %p280
    %p283 = scmp.ne.s32.totalorder %s268, %s282
    %p284 = scmp.eq.s32.totalorder %s27, 0
    %p285 = por %p283, %p284
    %s287 = sadd.s32 %s286, 1
    %p290 = scmp.eq.s32.totalorder %s21, 3
    %p291 = scmp.ne.s32.totalorder %s286, %s288
    %p292 = scmp.eq.s32.totalorder %s21, 0
    %p293 = por %p291, %p292
    %p294 = scmp.ne.s32.totalorder %s286, %s288
    %p295 = scmp.eq.s32.totalorder %s26, 3
    %p296 = por %p294, %p295
    %p297 = scmp.ne.s32.totalorder %s288, %s289
    %p298 = scmp.eq.s32.totalorder %s26, 0
    %p299 = por %p297, %p298
    %p300 = scmp.ne.s32.totalorder %s288, %s289
    %p301 = scmp.eq.s32.totalorder %s27, 3
    %p302 = por %p300, %p301
    %p304 = scmp.ne.s32.totalorder %s289, %s303
    %p305 = scmp.eq.s32.totalorder %s27, 0
    %p306 = por %p304, %p305
    %s308 = sadd.s32 %s307, 1
    %p311 = scmp.eq.s32.totalorder %s21, 3
    %p312 = scmp.ne.s32.totalorder %s307, %s309
    %p313 = scmp.eq.s32.totalorder %s21, 0
    %p314 = por %p312, %p313
    %p315 = scmp.ne.s32.totalorder %s307, %s309
    %p316 = scmp.eq.s32.totalorder %s26, 3
    %p317 = por %p315, %p316
    %p318 = scmp.ne.s32.totalorder %s309, %s310
    %p319 = scmp.eq.s32.totalorder %s26, 0
    %p320 = por %p318, %p319
    %p321 = scmp.ne.s32.totalorder %s309, %s310
    %p322 = scmp.eq.s32.totalorder %s27, 3
    %p323 = por %p321, %p322
    %p325 = scmp.ne.s32.totalorder %s310, %s324
    %p326 = scmp.eq.s32.totalorder %s27, 0
    %p327 = por %p325, %p326
    %s329 = sadd.s32 %s328, 1
    %p332 = scmp.eq.s32.totalorder %s21, 3
    %p333 = scmp.ne.s32.totalorder %s328, %s330
    %p334 = scmp.eq.s32.totalorder %s21, 0
    %p335 = por %p333, %p334
    %p336 = scmp.ne.s32.totalorder %s328, %s330
    %p337 = scmp.eq.s32.totalorder %s26, 3
    %p338 = por %p336, %p337
    %p339 = scmp.ne.s32.totalorder %s330, %s331
    %p340 = scmp.eq.s32.totalorder %s26, 0
    %p341 = por %p339, %p340
    %p342 = scmp.ne.s32.totalorder %s330, %s331
    %p343 = scmp.eq.s32.totalorder %s27, 3
    %p344 = por %p342, %p343
    %p346 = scmp.ne.s32.totalorder %s331, %s345
    %p347 = scmp.eq.s32.totalorder %s27, 0
    %p348 = por %p346, %p347
    %s349 = ssub.s32 %s21, %s28
    %p350 = scmp.eq.s32.totalorder %s349, 0
    %s352 = sadd.s32 %s351, 1
    %s353 = scalar_select %p350, %s351, %s352
    %p356 = pneg %p350
    %p357 = scmp.eq.s32.totalorder %s21, 3
    %p358 = por %p356, %p357
    %p359 = scmp.ne.s32.totalorder %s351, %s354
    %p360 = scmp.eq.s32.totalorder %s21, 0
    %p361 = por %p359, %p360
    %p362 = scmp.ne.s32.totalorder %s351, %s354
    %p363 = scmp.eq.s32.totalorder %s26, 3
    %p364 = por %p362, %p363
    %p365 = scmp.ne.s32.totalorder %s354, %s355
    %p366 = scmp.eq.s32.totalorder %s26, 0
    %p367 = por %p365, %p366
    %p368 = scmp.ne.s32.totalorder %s354, %s355
    %p369 = scmp.eq.s32.totalorder %s27, 3
    %p370 = por %p368, %p369
    %p372 = scmp.ne.s32.totalorder %s355, %s371
    %p373 = scmp.eq.s32.totalorder %s27, 0
    %p374 = por %p372, %p373
    %p375 = scmp.le.s32.totalorder 1, %s21
    %p376 = scmp.lt.s32.totalorder %s21, 5
    %p377 = pnand %p375, %p376
    %p378 = pneg %p377
    // Predicated region
    $region9: #{tpu_custom_call.1} parent=5 // pred_check
      _
    $region10: #{tpu_custom_call.1} parent=5 // pred_check_branch
      %380 = sbr.rel (%p377) target = $region12
    $region11: #{tpu_custom_call.1} parent=5 // pred_region
      %s381 = ssub.s32 %s21, 1
      // Predicated region
      $region13: #{tpu_custom_call.1} parent=11 // pred_check
        %p382 = pneg %p68
      $region14: #{tpu_custom_call.1} parent=11 // pred_check_branch
        %384 = sbr.rel (%p382) target = $region16
      $region15: #{tpu_custom_call.1} parent=11 // pred_region
        _
      $region16: #{tpu_custom_call.1} parent=11 // pred_fallthru
        _
      // Predicated region
      $region17: #{tpu_custom_call.1} parent=11 // pred_check
        %p385 = pneg %p89
      $region18: #{tpu_custom_call.1} parent=11 // pred_check_branch
        %387 = sbr.rel (%p385) target = $region20
      $region19: #{tpu_custom_call.1} parent=11 // pred_region
        _
      $region20: #{tpu_custom_call.1} parent=11 // pred_fallthru
        _
      // Predicated region
      $region21: #{tpu_custom_call.1} parent=11 // pred_check
        %p388 = pneg %p110
      $region22: #{tpu_custom_call.1} parent=11 // pred_check_branch
        %390 = sbr.rel (%p388) target = $region24
      $region23: #{tpu_custom_call.1} parent=11 // pred_region
        _
      $region24: #{tpu_custom_call.1} parent=11 // pred_fallthru
        _
      // Predicated region
      $region25: #{tpu_custom_call.1} parent=11 // pred_check
        %p391 = pneg %p131
      $region26: #{tpu_custom_call.1} parent=11 // pred_check_branch
        %393 = sbr.rel (%p391) target = $region28
      $region27: #{tpu_custom_call.1} parent=11 // pred_region
        _
      $region28: #{tpu_custom_call.1} parent=11 // pred_fallthru
        _
      // Predicated region
      $region29: #{tpu_custom_call.1} parent=11 // pred_check
        %p394 = pneg %p152
      $region30: #{tpu_custom_call.1} parent=11 // pred_check_branch
        %396 = sbr.rel (%p394) target = $region32
      $region31: #{tpu_custom_call.1} parent=11 // pred_region
        _
      $region32: #{tpu_custom_call.1} parent=11 // pred_fallthru
        _
      // Predicated region
      $region33: #{tpu_custom_call.1} parent=11 // pred_check
        %p397 = pneg %p173
      $region34: #{tpu_custom_call.1} parent=11 // pred_check_branch
        %399 = sbr.rel (%p397) target = $region36
      $region35: #{tpu_custom_call.1} parent=11 // pred_region
        _
      $region36: #{tpu_custom_call.1} parent=11 // pred_fallthru
        _
      // Predicated region
      $region37: #{tpu_custom_call.1} parent=11 // pred_check
        %p400 = pneg %p194
      $region38: #{tpu_custom_call.1} parent=11 // pred_check_branch
        %402 = sbr.rel (%p400) target = $region40
      $region39: #{tpu_custom_call.1} parent=11 // pred_region
        _
      $region40: #{tpu_custom_call.1} parent=11 // pred_fallthru
        _
      // Predicated region
      $region41: #{tpu_custom_call.1} parent=11 // pred_check
        %p403 = pneg %p215
      $region42: #{tpu_custom_call.1} parent=11 // pred_check_branch
        %405 = sbr.rel (%p403) target = $region44
      $region43: #{tpu_custom_call.1} parent=11 // pred_region
        _
      $region44: #{tpu_custom_call.1} parent=11 // pred_fallthru
        _
      // Predicated region
      $region45: #{tpu_custom_call.1} parent=11 // pred_check
        %p406 = pneg %p236
      $region46: #{tpu_custom_call.1} parent=11 // pred_check_branch
        %408 = sbr.rel (%p406) target = $region48
      $region47: #{tpu_custom_call.1} parent=11 // pred_region
        _
      $region48: #{tpu_custom_call.1} parent=11 // pred_fallthru
        _
      // Predicated region
      $region49: #{tpu_custom_call.1} parent=11 // pred_check
        %p409 = pneg %p257
      $region50: #{tpu_custom_call.1} parent=11 // pred_check_branch
        %411 = sbr.rel (%p409) target = $region52
      $region51: #{tpu_custom_call.1} parent=11 // pred_region
        _
      $region52: #{tpu_custom_call.1} parent=11 // pred_fallthru
        _
      // Predicated region
      $region53: #{tpu_custom_call.1} parent=11 // pred_check
        %p412 = pneg %p278
      $region54: #{tpu_custom_call.1} parent=11 // pred_check_branch
        %414 = sbr.rel (%p412) target = $region56
      $region55: #{tpu_custom_call.1} parent=11 // pred_region
        _
      $region56: #{tpu_custom_call.1} parent=11 // pred_fallthru
        _
      // Predicated region
      $region57: #{tpu_custom_call.1} parent=11 // pred_check
        %p415 = pneg %p299
      $region58: #{tpu_custom_call.1} parent=11 // pred_check_branch
        %417 = sbr.rel (%p415) target = $region60
      $region59: #{tpu_custom_call.1} parent=11 // pred_region
        _
      $region60: #{tpu_custom_call.1} parent=11 // pred_fallthru
        _
      // Predicated region
      $region61: #{tpu_custom_call.1} parent=11 // pred_check
        %p418 = pneg %p320
      $region62: #{tpu_custom_call.1} parent=11 // pred_check_branch
        %420 = sbr.rel (%p418) target = $region64
      $region63: #{tpu_custom_call.1} parent=11 // pred_region
        _
      $region64: #{tpu_custom_call.1} parent=11 // pred_fallthru
        _
      // Predicated region
      $region65: #{tpu_custom_call.1} parent=11 // pred_check
        %p421 = pneg %p341
      $region66: #{tpu_custom_call.1} parent=11 // pred_check_branch
        %423 = sbr.rel (%p421) target = $region68
      $region67: #{tpu_custom_call.1} parent=11 // pred_region
        _
      $region68: #{tpu_custom_call.1} parent=11 // pred_fallthru
        _
    $region12: #{tpu_custom_call.1} parent=5 // pred_fallthru
      _
    %p424 = scmp.lt.s32.totalorder %s21, 4
    // Predicated region
    $region69: #{tpu_custom_call.1} parent=5 // pred_check
      %p425 = pneg %p424
    $region70: #{tpu_custom_call.1} parent=5 // pred_check_branch
      %427 = sbr.rel (%p425) target = $region72
    $region71: #{tpu_custom_call.1} parent=5 // pred_region
      // Predicated region
      $region73: #{tpu_custom_call.1} parent=71 // pred_check
        %p428 = pneg %p41
      $region74: #{tpu_custom_call.1} parent=71 // pred_check_branch
        %430 = sbr.rel (%p428) target = $region76
      $region75: #{tpu_custom_call.1} parent=71 // pred_region
        %s431 = smul.u32 16, %s21
        %p432 = scmp.lt.s32.totalorder %s431, 63
        %s433 = scalar_select %p432, %s431, 63
        %s434 = smul.addr %s433, 8
        %s435 = scalar_lea.vmem %s0, %s434
        %s436 = smul.u32 16, %s21
      $region76: #{tpu_custom_call.1} parent=71 // pred_fallthru
        _
    $region72: #{tpu_custom_call.1} parent=5 // pred_fallthru
      _
    %p437 = scmp.le.s32.totalorder 1, %s21
    %p438 = scmp.lt.s32.totalorder %s21, 5
    %p439 = pnand %p437, %p438
    %p440 = pneg %p439
    // Predicated region
    $region77: #{tpu_custom_call.1} parent=5 // pred_check
      _
    $region78: #{tpu_custom_call.1} parent=5 // pred_check_branch
      %442 = sbr.rel (%p439) target = $region80
    $region79: #{tpu_custom_call.1} parent=5 // pred_region
      %s443 = ssub.s32 %s21, 1
      %s444 = smul.u32 16, %s26
      %p445 = scmp.lt.s32.totalorder %s444, 63
      %s446 = scalar_select %p445, %s444, 63
      %s447 = smul.addr %s446, 8
      %s448 = scalar_lea.vmem %s0, %s447
      %p449 = pneg %p47
      %p450 = pneg %p44
      %p451 = pneg %p68
      %p452 = pneg %p65
      %p453 = pneg %p89
      %p454 = pneg %p86
      %p455 = pneg %p110
      %p456 = pneg %p107
      %p457 = pneg %p131
      %p458 = pneg %p128
      %p459 = pneg %p152
      %p460 = pneg %p149
      %p461 = pneg %p173
      %p462 = pneg %p170
      %p463 = pneg %p194
      %p464 = pneg %p191
      %p465 = pneg %p215
      %p466 = pneg %p212
      %p467 = pneg %p236
      %p468 = pneg %p233
      %p469 = pneg %p257
      %p470 = pneg %p254
      %p471 = pneg %p278
      %p472 = pneg %p275
      %p473 = pneg %p299
      %p474 = pneg %p296
      %p475 = pneg %p320
      %p476 = pneg %p317
      %p477 = pneg %p341
      %p478 = pneg %p338
      %p479 = pneg %p367
      %p480 = pneg %p364
      %s481 = smul.u32 16, %s26
      %p482 = scmp.lt.s32.totalorder %s481, 63
      %s483 = scalar_select %p482, %s481, 63
      %s484 = smul.addr %s483, 8
      %s485 = scalar_lea.vmem %s15, %s484
      %s486 = smul.u32 16, %s26
      %p487 = scmp.lt.s32.totalorder %s486, 63
      %s488 = scalar_select %p487, %s486, 63
      %s489 = smul.addr %s488, 8
      %s490 = scalar_lea.vmem %s0, %s489
      %s491 = smul.u32 16, %s26
      %s492 = smul.u32 16, %s26
      %p493 = scmp.lt.s32.totalorder %s492, 63
      %s494 = scalar_select %p493, %s492, 63
      %s495 = smul.addr %s494, 8
      %s496 = scalar_lea.vmem %s15, %s495
      %s497 = smul.u32 16, %s26
      %v499 = vld [vmem:[%s490] sm:$0xff]
      %v500 = vld [vmem:[%s490 + $0x8] sm:$0xff]
      %v501 = vld [vmem:[%s490 + $0x10] sm:$0xff]
      %v502 = vld [vmem:[%s490 + $0x18] sm:$0xff]
      %v503 = vld [vmem:[%s490 + $0x20] sm:$0xff]
      %v504 = vld [vmem:[%s490 + $0x28] sm:$0xff]
      %v505 = vld [vmem:[%s490 + $0x30] sm:$0xff]
      %v506 = vld [vmem:[%s490 + $0x38] sm:$0xff]
      %v507 = vld [vmem:[%s490 + $0x40] sm:$0xff]
      %v508 = vld [vmem:[%s490 + $0x48] sm:$0xff]
      %v509 = vld [vmem:[%s490 + $0x50] sm:$0xff]
      %v510 = vld [vmem:[%s490 + $0x58] sm:$0xff]
      %v511 = vld [vmem:[%s490 + $0x60] sm:$0xff]
      %v512 = vld [vmem:[%s490 + $0x68] sm:$0xff]
      %v513 = vld [vmem:[%s490 + $0x70] sm:$0xff]
      %v514 = vld [vmem:[%s490 + $0x78] sm:$0xff]
      %v515 = vld [vmem:[%s3] sm:$0x1]
      %v517 = vperm.slane %v515, 0
      %v519 = vsub.f32 %v499, %v517
      %v520 = vsub.f32 %v500, %v517
      %v521 = vsub.f32 %v501, %v517
      %v522 = vsub.f32 %v502, %v517
      %v523 = vsub.f32 %v503, %v517
      %v524 = vsub.f32 %v504, %v517
      %v525 = vsub.f32 %v505, %v517
      %v526 = vsub.f32 %v506, %v517
      %v527 = vsub.f32 %v507, %v517
      %v528 = vsub.f32 %v508, %v517
      %v529 = vsub.f32 %v509, %v517
      %v530 = vsub.f32 %v510, %v517
      %v531 = vsub.f32 %v511, %v517
      %v532 = vsub.f32 %v512, %v517
      %v533 = vsub.f32 %v513, %v517
      %v534 = vsub.f32 %v514, %v517
      %v535 = vpack.c.bf16 %v520, %v519
      %v536 = vpack.c.bf16 %v522, %v521
      %v537 = vpack.c.bf16 %v524, %v523
      %v538 = vpack.c.bf16 %v526, %v525
      %v539 = vpack.c.bf16 %v528, %v527
      %v540 = vpack.c.bf16 %v530, %v529
      %v541 = vpack.c.bf16 %v532, %v531
      %v542 = vpack.c.bf16 %v534, %v533
      %v543 = vld [vmem:[%s1] sm:$0xf]
      %v544 = vld [vmem:[%s1 + $0x4] sm:$0xf]
      %v545 = vld [vmem:[%s1 + $0x8] sm:$0xf]
      %v546 = vld [vmem:[%s1 + $0xc] sm:$0xf]
      %v547 = vld [vmem:[%s2] sm:$0x1]
      %v549 = vperm.slane %v547, 0
      %v555 = vunpack.c.l.b16 %v543
      %v556 = vunpack.c.l.b16 %v544
      %v557 = vunpack.c.l.b16 %v545
      %v558 = vunpack.c.l.b16 %v546
      %v559 = vpack.c.b16 %v556, %v555
      %v560 = vpack.c.b16 %v558, %v557
      %vm563 = vcmask 261120
      %v565 = vsel %vm563, %v535, 0
      %v568 = vsel %vm563, %v536, 0
      %v571 = vsel %vm563, %v537, 0
      %v574 = vsel %vm563, %v538, 0
      %v577 = vsel %vm563, %v539, 0
      %v580 = vsel %vm563, %v540, 0
      %v583 = vsel %vm563, %v541, 0
      %v586 = vsel %vm563, %v542, 0
      %588 = vmatpush.bf16.msra.mxu0 0
      %589 = vmatpush.bf16.msra.mxu0 0
      %590 = vmatpush.bf16.msra.mxu0 0
      %591 = vmatpush.bf16.msra.mxu0 0
      %592 = vmatpush.bf16.msra.mxu0 0
      %593 = vmatpush.bf16.msra.mxu0 0
      %594 = vmatpush.bf16.msra.mxu0 %v560
      %595 = vmatpush.bf16.msra.mxu0 %v559
      %596 = vmatmul.bf16.gmra.mxu0 %v565
      %v597 = vpop.f32.mrf.mxu0
      %v598 = vadd.f32 %v549, %v597
      %v599 = vpop.f32.mrf.mxu0
      %v600 = vadd.f32 %v549, %v599
      %601 = vmatmul.bf16.gmra.mxu0 %v568
      %v602 = vpop.f32.mrf.mxu0
      %v603 = vadd.f32 %v549, %v602
      %v604 = vpop.f32.mrf.mxu0
      %v605 = vadd.f32 %v549, %v604
      %606 = vmatmul.bf16.gmra.mxu0 %v571
      %v607 = vpop.f32.mrf.mxu0
      %v608 = vadd.f32 %v549, %v607
      %v609 = vpop.f32.mrf.mxu0
      %v610 = vadd.f32 %v549, %v609
      %611 = vmatmul.bf16.gmra.mxu0 %v574
      %v612 = vpop.f32.mrf.mxu0
      %v613 = vadd.f32 %v549, %v612
      %v614 = vpop.f32.mrf.mxu0
      %v615 = vadd.f32 %v549, %v614
      %616 = vmatmul.bf16.gmra.mxu0 %v577
      %v617 = vpop.f32.mrf.mxu0
      %v618 = vadd.f32 %v549, %v617
      %v619 = vpop.f32.mrf.mxu0
      %v620 = vadd.f32 %v549, %v619
      %621 = vmatmul.bf16.gmra.mxu0 %v580
      %v622 = vpop.f32.mrf.mxu0
      %v623 = vadd.f32 %v549, %v622
      %v624 = vpop.f32.mrf.mxu0
      %v625 = vadd.f32 %v549, %v624
      %626 = vmatmul.bf16.gmra.mxu0 %v583
      %v627 = vpop.f32.mrf.mxu0
      %v628 = vadd.f32 %v549, %v627
      %v629 = vpop.f32.mrf.mxu0
      %v630 = vadd.f32 %v549, %v629
      %631 = vmatmul.bf16.gmra.mxu0 %v586
      %v632 = vpop.f32.mrf.mxu0
      %v633 = vadd.f32 %v549, %v632
      %v634 = vpop.f32.mrf.mxu0
      %v635 = vadd.f32 %v549, %v634
      %636 = vdwg.mxu0
      %v637 = vmax.f32 %v598, 0.0
      %v638 = vmax.f32 %v600, 0.0
      %v639 = vmax.f32 %v603, 0.0
      %v640 = vmax.f32 %v605, 0.0
      %v641 = vmax.f32 %v608, 0.0
      %v642 = vmax.f32 %v610, 0.0
      %v643 = vmax.f32 %v613, 0.0
      %v644 = vmax.f32 %v615, 0.0
      %v645 = vmax.f32 %v618, 0.0
      %v646 = vmax.f32 %v620, 0.0
      %v647 = vmax.f32 %v623, 0.0
      %v648 = vmax.f32 %v625, 0.0
      %v649 = vmax.f32 %v628, 0.0
      %v650 = vmax.f32 %v630, 0.0
      %v651 = vmax.f32 %v633, 0.0
      %v652 = vmax.f32 %v635, 0.0
      %653 = vmax.xlane.f32.xlu0 %v637
      %v654 = vpop.xlane.xlu0 %653
      %655 = vmax.xlane.f32.xlu0 %v638
      %v656 = vpop.xlane.xlu0 %655
      %657 = vmax.xlane.f32.xlu0 %v639
      %v658 = vpop.xlane.xlu0 %657
      %659 = vmax.xlane.f32.xlu0 %v640
      %v660 = vpop.xlane.xlu0 %659
      %661 = vmax.xlane.f32.xlu0 %v641
      %v662 = vpop.xlane.xlu0 %661
      %663 = vmax.xlane.f32.xlu0 %v642
      %v664 = vpop.xlane.xlu0 %663
      %665 = vmax.xlane.f32.xlu0 %v643
      %v666 = vpop.xlane.xlu0 %665
      %667 = vmax.xlane.f32.xlu0 %v644
      %v668 = vpop.xlane.xlu0 %667
      %669 = vmax.xlane.f32.xlu0 %v645
      %v670 = vpop.xlane.xlu0 %669
      %671 = vmax.xlane.f32.xlu0 %v646
      %v672 = vpop.xlane.xlu0 %671
      %673 = vmax.xlane.f32.xlu0 %v647
      %v674 = vpop.xlane.xlu0 %673
      %675 = vmax.xlane.f32.xlu0 %v648
      %v676 = vpop.xlane.xlu0 %675
      %677 = vmax.xlane.f32.xlu0 %v649
      %v678 = vpop.xlane.xlu0 %677
      %679 = vmax.xlane.f32.xlu0 %v650
      %v680 = vpop.xlane.xlu0 %679
      %681 = vmax.xlane.f32.xlu0 %v651
      %v682 = vpop.xlane.xlu0 %681
      %683 = vmax.xlane.f32.xlu0 %v652
      %v684 = vpop.xlane.xlu0 %683
      %vm685 = vcmp.ge.f32.partialorder %v637, %v654
      %vm686 = vcmp.ge.f32.partialorder %v638, %v656
      %vm687 = vcmp.ge.f32.partialorder %v639, %v658
      %vm688 = vcmp.ge.f32.partialorder %v640, %v660
      %vm689 = vcmp.ge.f32.partialorder %v641, %v662
      %vm690 = vcmp.ge.f32.partialorder %v642, %v664
      %vm691 = vcmp.ge.f32.partialorder %v643, %v666
      %vm692 = vcmp.ge.f32.partialorder %v644, %v668
      %vm693 = vcmp.ge.f32.partialorder %v645, %v670
      %vm694 = vcmp.ge.f32.partialorder %v646, %v672
      %vm695 = vcmp.ge.f32.partialorder %v647, %v674
      %vm696 = vcmp.ge.f32.partialorder %v648, %v676
      %vm697 = vcmp.ge.f32.partialorder %v649, %v678
      %vm698 = vcmp.ge.f32.partialorder %v650, %v680
      %vm699 = vcmp.ge.f32.partialorder %v651, %v682
      %vm700 = vcmp.ge.f32.partialorder %v652, %v684
      %v701 = vsel %vm685, -1e+30, %v637
      %v702 = vsel %vm686, -1e+30, %v638
      %v703 = vsel %vm687, -1e+30, %v639
      %v704 = vsel %vm688, -1e+30, %v640
      %v705 = vsel %vm689, -1e+30, %v641
      %v706 = vsel %vm690, -1e+30, %v642
      %v707 = vsel %vm691, -1e+30, %v643
      %v708 = vsel %vm692, -1e+30, %v644
      %v709 = vsel %vm693, -1e+30, %v645
      %v710 = vsel %vm694, -1e+30, %v646
      %v711 = vsel %vm695, -1e+30, %v647
      %v712 = vsel %vm696, -1e+30, %v648
      %v713 = vsel %vm697, -1e+30, %v649
      %v714 = vsel %vm698, -1e+30, %v650
      %v715 = vsel %vm699, -1e+30, %v651
      %v716 = vsel %vm700, -1e+30, %v652
      %717 = vmax.xlane.f32.xlu0 %v701
      %v718 = vpop.xlane.xlu0 %717
      %719 = vmax.xlane.f32.xlu0 %v702
      %v720 = vpop.xlane.xlu0 %719
      %721 = vmax.xlane.f32.xlu0 %v703
      %v722 = vpop.xlane.xlu0 %721
      %723 = vmax.xlane.f32.xlu0 %v704
      %v724 = vpop.xlane.xlu0 %723
      %725 = vmax.xlane.f32.xlu0 %v705
      %v726 = vpop.xlane.xlu0 %725
      %727 = vmax.xlane.f32.xlu0 %v706
      %v728 = vpop.xlane.xlu0 %727
      %729 = vmax.xlane.f32.xlu0 %v707
      %v730 = vpop.xlane.xlu0 %729
      %731 = vmax.xlane.f32.xlu0 %v708
      %v732 = vpop.xlane.xlu0 %731
      %733 = vmax.xlane.f32.xlu0 %v709
      %v734 = vpop.xlane.xlu0 %733
      %735 = vmax.xlane.f32.xlu0 %v710
      %v736 = vpop.xlane.xlu0 %735
      %737 = vmax.xlane.f32.xlu0 %v711
      %v738 = vpop.xlane.xlu0 %737
      %739 = vmax.xlane.f32.xlu0 %v712
      %v740 = vpop.xlane.xlu0 %739
      %741 = vmax.xlane.f32.xlu0 %v713
      %v742 = vpop.xlane.xlu0 %741
      %743 = vmax.xlane.f32.xlu0 %v714
      %v744 = vpop.xlane.xlu0 %743
      %745 = vmax.xlane.f32.xlu0 %v715
      %v746 = vpop.xlane.xlu0 %745
      %747 = vmax.xlane.f32.xlu0 %v716
      %v748 = vpop.xlane.xlu0 %747
      %vm749 = vcmp.ge.f32.partialorder %v701, %v718
      %vm750 = vcmp.ge.f32.partialorder %v702, %v720
      %vm751 = vcmp.ge.f32.partialorder %v703, %v722
      %vm752 = vcmp.ge.f32.partialorder %v704, %v724
      %vm753 = vcmp.ge.f32.partialorder %v705, %v726
      %vm754 = vcmp.ge.f32.partialorder %v706, %v728
      %vm755 = vcmp.ge.f32.partialorder %v707, %v730
      %vm756 = vcmp.ge.f32.partialorder %v708, %v732
      %vm757 = vcmp.ge.f32.partialorder %v709, %v734
      %vm758 = vcmp.ge.f32.partialorder %v710, %v736
      %vm759 = vcmp.ge.f32.partialorder %v711, %v738
      %vm760 = vcmp.ge.f32.partialorder %v712, %v740
      %vm761 = vcmp.ge.f32.partialorder %v713, %v742
      %vm762 = vcmp.ge.f32.partialorder %v714, %v744
      %vm763 = vcmp.ge.f32.partialorder %v715, %v746
      %vm764 = vcmp.ge.f32.partialorder %v716, %v748
      %v765 = vsel %vm749, -1e+30, %v701
      %v766 = vsel %vm750, -1e+30, %v702
      %v767 = vsel %vm751, -1e+30, %v703
      %v768 = vsel %vm752, -1e+30, %v704
      %v769 = vsel %vm753, -1e+30, %v705
      %v770 = vsel %vm754, -1e+30, %v706
      %v771 = vsel %vm755, -1e+30, %v707
      %v772 = vsel %vm756, -1e+30, %v708
      %v773 = vsel %vm757, -1e+30, %v709
      %v774 = vsel %vm758, -1e+30, %v710
      %v775 = vsel %vm759, -1e+30, %v711
      %v776 = vsel %vm760, -1e+30, %v712
      %v777 = vsel %vm761, -1e+30, %v713
      %v778 = vsel %vm762, -1e+30, %v714
      %v779 = vsel %vm763, -1e+30, %v715
      %v780 = vsel %vm764, -1e+30, %v716
      %781 = vmax.xlane.f32.xlu0 %v765
      %v782 = vpop.xlane.xlu0 %781
      %783 = vmax.xlane.f32.xlu0 %v766
      %v784 = vpop.xlane.xlu0 %783
      %785 = vmax.xlane.f32.xlu0 %v767
      %v786 = vpop.xlane.xlu0 %785
      %787 = vmax.xlane.f32.xlu0 %v768
      %v788 = vpop.xlane.xlu0 %787
      %789 = vmax.xlane.f32.xlu0 %v769
      %v790 = vpop.xlane.xlu0 %789
      %791 = vmax.xlane.f32.xlu0 %v770
      %v792 = vpop.xlane.xlu0 %791
      %793 = vmax.xlane.f32.xlu0 %v771
      %v794 = vpop.xlane.xlu0 %793
      %795 = vmax.xlane.f32.xlu0 %v772
      %v796 = vpop.xlane.xlu0 %795
      %797 = vmax.xlane.f32.xlu0 %v773
      %v798 = vpop.xlane.xlu0 %797
      %799 = vmax.xlane.f32.xlu0 %v774
      %v800 = vpop.xlane.xlu0 %799
      %801 = vmax.xlane.f32.xlu0 %v775
      %v802 = vpop.xlane.xlu0 %801
      %803 = vmax.xlane.f32.xlu0 %v776
      %v804 = vpop.xlane.xlu0 %803
      %805 = vmax.xlane.f32.xlu0 %v777
      %v806 = vpop.xlane.xlu0 %805
      %807 = vmax.xlane.f32.xlu0 %v778
      %v808 = vpop.xlane.xlu0 %807
      %809 = vmax.xlane.f32.xlu0 %v779
      %v810 = vpop.xlane.xlu0 %809
      %811 = vmax.xlane.f32.xlu0 %v780
      %v812 = vpop.xlane.xlu0 %811
      %vm813 = vcmp.ge.f32.partialorder %v765, %v782
      %vm814 = vcmp.ge.f32.partialorder %v766, %v784
      %vm815 = vcmp.ge.f32.partialorder %v767, %v786
      %vm816 = vcmp.ge.f32.partialorder %v768, %v788
      %vm817 = vcmp.ge.f32.partialorder %v769, %v790
      %vm818 = vcmp.ge.f32.partialorder %v770, %v792
      %vm819 = vcmp.ge.f32.partialorder %v771, %v794
      %vm820 = vcmp.ge.f32.partialorder %v772, %v796
      %vm821 = vcmp.ge.f32.partialorder %v773, %v798
      %vm822 = vcmp.ge.f32.partialorder %v774, %v800
      %vm823 = vcmp.ge.f32.partialorder %v775, %v802
      %vm824 = vcmp.ge.f32.partialorder %v776, %v804
      %vm825 = vcmp.ge.f32.partialorder %v777, %v806
      %vm826 = vcmp.ge.f32.partialorder %v778, %v808
      %vm827 = vcmp.ge.f32.partialorder %v779, %v810
      %vm828 = vcmp.ge.f32.partialorder %v780, %v812
      %v829 = vsel %vm813, -1e+30, %v765
      %v830 = vsel %vm814, -1e+30, %v766
      %v831 = vsel %vm815, -1e+30, %v767
      %v832 = vsel %vm816, -1e+30, %v768
      %v833 = vsel %vm817, -1e+30, %v769
      %v834 = vsel %vm818, -1e+30, %v770
      %v835 = vsel %vm819, -1e+30, %v771
      %v836 = vsel %vm820, -1e+30, %v772
      %v837 = vsel %vm821, -1e+30, %v773
      %v838 = vsel %vm822, -1e+30, %v774
      %v839 = vsel %vm823, -1e+30, %v775
      %v840 = vsel %vm824, -1e+30, %v776
      %v841 = vsel %vm825, -1e+30, %v777
      %v842 = vsel %vm826, -1e+30, %v778
      %v843 = vsel %vm827, -1e+30, %v779
      %v844 = vsel %vm828, -1e+30, %v780
      %845 = vmax.xlane.f32.xlu0 %v829
      %v846 = vpop.xlane.xlu0 %845
      %847 = vmax.xlane.f32.xlu0 %v830
      %v848 = vpop.xlane.xlu0 %847
      %849 = vmax.xlane.f32.xlu0 %v831
      %v850 = vpop.xlane.xlu0 %849
      %851 = vmax.xlane.f32.xlu0 %v832
      %v852 = vpop.xlane.xlu0 %851
      %853 = vmax.xlane.f32.xlu0 %v833
      %v854 = vpop.xlane.xlu0 %853
      %855 = vmax.xlane.f32.xlu0 %v834
      %v856 = vpop.xlane.xlu0 %855
      %857 = vmax.xlane.f32.xlu0 %v835
      %v858 = vpop.xlane.xlu0 %857
      %859 = vmax.xlane.f32.xlu0 %v836
      %v860 = vpop.xlane.xlu0 %859
      %861 = vmax.xlane.f32.xlu0 %v837
      %v862 = vpop.xlane.xlu0 %861
      %863 = vmax.xlane.f32.xlu0 %v838
      %v864 = vpop.xlane.xlu0 %863
      %865 = vmax.xlane.f32.xlu0 %v839
      %v866 = vpop.xlane.xlu0 %865
      %867 = vmax.xlane.f32.xlu0 %v840
      %v868 = vpop.xlane.xlu0 %867
      %869 = vmax.xlane.f32.xlu0 %v841
      %v870 = vpop.xlane.xlu0 %869
      %871 = vmax.xlane.f32.xlu0 %v842
      %v872 = vpop.xlane.xlu0 %871
      %873 = vmax.xlane.f32.xlu0 %v843
      %v874 = vpop.xlane.xlu0 %873
      %875 = vmax.xlane.f32.xlu0 %v844
      %v876 = vpop.xlane.xlu0 %875
      %vm877 = vcmp.ge.f32.partialorder %v829, %v846
      %vm878 = vcmp.ge.f32.partialorder %v830, %v848
      %vm879 = vcmp.ge.f32.partialorder %v831, %v850
      %vm880 = vcmp.ge.f32.partialorder %v832, %v852
      %vm881 = vcmp.ge.f32.partialorder %v833, %v854
      %vm882 = vcmp.ge.f32.partialorder %v834, %v856
      %vm883 = vcmp.ge.f32.partialorder %v835, %v858
      %vm884 = vcmp.ge.f32.partialorder %v836, %v860
      %vm885 = vcmp.ge.f32.partialorder %v837, %v862
      %vm886 = vcmp.ge.f32.partialorder %v838, %v864
      %vm887 = vcmp.ge.f32.partialorder %v839, %v866
      %vm888 = vcmp.ge.f32.partialorder %v840, %v868
      %vm889 = vcmp.ge.f32.partialorder %v841, %v870
      %vm890 = vcmp.ge.f32.partialorder %v842, %v872
      %vm891 = vcmp.ge.f32.partialorder %v843, %v874
      %vm892 = vcmp.ge.f32.partialorder %v844, %v876
      %v893 = vsel %vm877, -1e+30, %v829
      %v894 = vsel %vm878, -1e+30, %v830
      %v895 = vsel %vm879, -1e+30, %v831
      %v896 = vsel %vm880, -1e+30, %v832
      %v897 = vsel %vm881, -1e+30, %v833
      %v898 = vsel %vm882, -1e+30, %v834
      %v899 = vsel %vm883, -1e+30, %v835
      %v900 = vsel %vm884, -1e+30, %v836
      %v901 = vsel %vm885, -1e+30, %v837
      %v902 = vsel %vm886, -1e+30, %v838
      %v903 = vsel %vm887, -1e+30, %v839
      %v904 = vsel %vm888, -1e+30, %v840
      %v905 = vsel %vm889, -1e+30, %v841
      %v906 = vsel %vm890, -1e+30, %v842
      %v907 = vsel %vm891, -1e+30, %v843
      %v908 = vsel %vm892, -1e+30, %v844
      %909 = vmax.xlane.f32.xlu0 %v893
      %v910 = vpop.xlane.xlu0 %909
      %911 = vmax.xlane.f32.xlu0 %v894
      %v912 = vpop.xlane.xlu0 %911
      %913 = vmax.xlane.f32.xlu0 %v895
      %v914 = vpop.xlane.xlu0 %913
      %915 = vmax.xlane.f32.xlu0 %v896
      %v916 = vpop.xlane.xlu0 %915
      %917 = vmax.xlane.f32.xlu0 %v897
      %v918 = vpop.xlane.xlu0 %917
      %919 = vmax.xlane.f32.xlu0 %v898
      %v920 = vpop.xlane.xlu0 %919
      %921 = vmax.xlane.f32.xlu0 %v899
      %v922 = vpop.xlane.xlu0 %921
      %923 = vmax.xlane.f32.xlu0 %v900
      %v924 = vpop.xlane.xlu0 %923
      %925 = vmax.xlane.f32.xlu0 %v901
      %v926 = vpop.xlane.xlu0 %925
      %927 = vmax.xlane.f32.xlu0 %v902
      %v928 = vpop.xlane.xlu0 %927
      %929 = vmax.xlane.f32.xlu0 %v903
      %v930 = vpop.xlane.xlu0 %929
      %931 = vmax.xlane.f32.xlu0 %v904
      %v932 = vpop.xlane.xlu0 %931
      %933 = vmax.xlane.f32.xlu0 %v905
      %v934 = vpop.xlane.xlu0 %933
      %935 = vmax.xlane.f32.xlu0 %v906
      %v936 = vpop.xlane.xlu0 %935
      %937 = vmax.xlane.f32.xlu0 %v907
      %v938 = vpop.xlane.xlu0 %937
      %939 = vmax.xlane.f32.xlu0 %v908
      %v940 = vpop.xlane.xlu0 %939
      %vm941 = vcmp.ge.f32.partialorder %v893, %v910
      %vm942 = vcmp.ge.f32.partialorder %v894, %v912
      %vm943 = vcmp.ge.f32.partialorder %v895, %v914
      %vm944 = vcmp.ge.f32.partialorder %v896, %v916
      %vm945 = vcmp.ge.f32.partialorder %v897, %v918
      %vm946 = vcmp.ge.f32.partialorder %v898, %v920
      %vm947 = vcmp.ge.f32.partialorder %v899, %v922
      %vm948 = vcmp.ge.f32.partialorder %v900, %v924
      %vm949 = vcmp.ge.f32.partialorder %v901, %v926
      %vm950 = vcmp.ge.f32.partialorder %v902, %v928
      %vm951 = vcmp.ge.f32.partialorder %v903, %v930
      %vm952 = vcmp.ge.f32.partialorder %v904, %v932
      %vm953 = vcmp.ge.f32.partialorder %v905, %v934
      %vm954 = vcmp.ge.f32.partialorder %v906, %v936
      %vm955 = vcmp.ge.f32.partialorder %v907, %v938
      %vm956 = vcmp.ge.f32.partialorder %v908, %v940
      %v957 = vsel %vm941, -1e+30, %v893
      %v958 = vsel %vm942, -1e+30, %v894
      %v959 = vsel %vm943, -1e+30, %v895
      %v960 = vsel %vm944, -1e+30, %v896
      %v961 = vsel %vm945, -1e+30, %v897
      %v962 = vsel %vm946, -1e+30, %v898
      %v963 = vsel %vm947, -1e+30, %v899
      %v964 = vsel %vm948, -1e+30, %v900
      %v965 = vsel %vm949, -1e+30, %v901
      %v966 = vsel %vm950, -1e+30, %v902
      %v967 = vsel %vm951, -1e+30, %v903
      %v968 = vsel %vm952, -1e+30, %v904
      %v969 = vsel %vm953, -1e+30, %v905
      %v970 = vsel %vm954, -1e+30, %v906
      %v971 = vsel %vm955, -1e+30, %v907
      %v972 = vsel %vm956, -1e+30, %v908
      %973 = vmax.xlane.f32.xlu0 %v957
      %v974 = vpop.xlane.xlu0 %973
      %975 = vmax.xlane.f32.xlu0 %v958
      %v976 = vpop.xlane.xlu0 %975
      %977 = vmax.xlane.f32.xlu0 %v959
      %v978 = vpop.xlane.xlu0 %977
      %979 = vmax.xlane.f32.xlu0 %v960
      %v980 = vpop.xlane.xlu0 %979
      %981 = vmax.xlane.f32.xlu0 %v961
      %v982 = vpop.xlane.xlu0 %981
      %983 = vmax.xlane.f32.xlu0 %v962
      %v984 = vpop.xlane.xlu0 %983
      %985 = vmax.xlane.f32.xlu0 %v963
      %v986 = vpop.xlane.xlu0 %985
      %987 = vmax.xlane.f32.xlu0 %v964
      %v988 = vpop.xlane.xlu0 %987
      %989 = vmax.xlane.f32.xlu0 %v965
      %v990 = vpop.xlane.xlu0 %989
      %991 = vmax.xlane.f32.xlu0 %v966
      %v992 = vpop.xlane.xlu0 %991
      %993 = vmax.xlane.f32.xlu0 %v967
      %v994 = vpop.xlane.xlu0 %993
      %995 = vmax.xlane.f32.xlu0 %v968
      %v996 = vpop.xlane.xlu0 %995
      %997 = vmax.xlane.f32.xlu0 %v969
      %v998 = vpop.xlane.xlu0 %997
      %999 = vmax.xlane.f32.xlu0 %v970
      %v1000 = vpop.xlane.xlu0 %999
      %1001 = vmax.xlane.f32.xlu0 %v971
      %v1002 = vpop.xlane.xlu0 %1001
      %1003 = vmax.xlane.f32.xlu0 %v972
      %v1004 = vpop.xlane.xlu0 %1003
      %vm1005 = vcmp.ge.f32.partialorder %v957, %v974
      %vm1006 = vcmp.ge.f32.partialorder %v958, %v976
      %vm1007 = vcmp.ge.f32.partialorder %v959, %v978
      %vm1008 = vcmp.ge.f32.partialorder %v960, %v980
      %vm1009 = vcmp.ge.f32.partialorder %v961, %v982
      %vm1010 = vcmp.ge.f32.partialorder %v962, %v984
      %vm1011 = vcmp.ge.f32.partialorder %v963, %v986
      %vm1012 = vcmp.ge.f32.partialorder %v964, %v988
      %vm1013 = vcmp.ge.f32.partialorder %v965, %v990
      %vm1014 = vcmp.ge.f32.partialorder %v966, %v992
      %vm1015 = vcmp.ge.f32.partialorder %v967, %v994
      %vm1016 = vcmp.ge.f32.partialorder %v968, %v996
      %vm1017 = vcmp.ge.f32.partialorder %v969, %v998
      %vm1018 = vcmp.ge.f32.partialorder %v970, %v1000
      %vm1019 = vcmp.ge.f32.partialorder %v971, %v1002
      %vm1020 = vcmp.ge.f32.partialorder %v972, %v1004
      %v1021 = vsel %vm1005, -1e+30, %v957
      %v1022 = vsel %vm1006, -1e+30, %v958
      %v1023 = vsel %vm1007, -1e+30, %v959
      %v1024 = vsel %vm1008, -1e+30, %v960
      %v1025 = vsel %vm1009, -1e+30, %v961
      %v1026 = vsel %vm1010, -1e+30, %v962
      %v1027 = vsel %vm1011, -1e+30, %v963
      %v1028 = vsel %vm1012, -1e+30, %v964
      %v1029 = vsel %vm1013, -1e+30, %v965
      %v1030 = vsel %vm1014, -1e+30, %v966
      %v1031 = vsel %vm1015, -1e+30, %v967
      %v1032 = vsel %vm1016, -1e+30, %v968
      %v1033 = vsel %vm1017, -1e+30, %v969
      %v1034 = vsel %vm1018, -1e+30, %v970
      %v1035 = vsel %vm1019, -1e+30, %v971
      %v1036 = vsel %vm1020, -1e+30, %v972
      %1037 = vmax.xlane.f32.xlu0 %v1021
      %v1038 = vpop.xlane.xlu0 %1037
      %1039 = vmax.xlane.f32.xlu0 %v1022
      %v1040 = vpop.xlane.xlu0 %1039
      %1041 = vmax.xlane.f32.xlu0 %v1023
      %v1042 = vpop.xlane.xlu0 %1041
      %1043 = vmax.xlane.f32.xlu0 %v1024
      %v1044 = vpop.xlane.xlu0 %1043
      %1045 = vmax.xlane.f32.xlu0 %v1025
      %v1046 = vpop.xlane.xlu0 %1045
      %1047 = vmax.xlane.f32.xlu0 %v1026
      %v1048 = vpop.xlane.xlu0 %1047
      %1049 = vmax.xlane.f32.xlu0 %v1027
      %v1050 = vpop.xlane.xlu0 %1049
      %1051 = vmax.xlane.f32.xlu0 %v1028
      %v1052 = vpop.xlane.xlu0 %1051
      %1053 = vmax.xlane.f32.xlu0 %v1029
      %v1054 = vpop.xlane.xlu0 %1053
      %1055 = vmax.xlane.f32.xlu0 %v1030
      %v1056 = vpop.xlane.xlu0 %1055
      %1057 = vmax.xlane.f32.xlu0 %v1031
      %v1058 = vpop.xlane.xlu0 %1057
      %1059 = vmax.xlane.f32.xlu0 %v1032
      %v1060 = vpop.xlane.xlu0 %1059
      %1061 = vmax.xlane.f32.xlu0 %v1033
      %v1062 = vpop.xlane.xlu0 %1061
      %1063 = vmax.xlane.f32.xlu0 %v1034
      %v1064 = vpop.xlane.xlu0 %1063
      %1065 = vmax.xlane.f32.xlu0 %v1035
      %v1066 = vpop.xlane.xlu0 %1065
      %1067 = vmax.xlane.f32.xlu0 %v1036
      %v1068 = vpop.xlane.xlu0 %1067
      %vm1069 = vcmp.ge.f32.partialorder %v1021, %v1038
      %vm1070 = vcmp.ge.f32.partialorder %v1022, %v1040
      %vm1071 = vcmp.ge.f32.partialorder %v1023, %v1042
      %vm1072 = vcmp.ge.f32.partialorder %v1024, %v1044
      %vm1073 = vcmp.ge.f32.partialorder %v1025, %v1046
      %vm1074 = vcmp.ge.f32.partialorder %v1026, %v1048
      %vm1075 = vcmp.ge.f32.partialorder %v1027, %v1050
      %vm1076 = vcmp.ge.f32.partialorder %v1028, %v1052
      %vm1077 = vcmp.ge.f32.partialorder %v1029, %v1054
      %vm1078 = vcmp.ge.f32.partialorder %v1030, %v1056
      %vm1079 = vcmp.ge.f32.partialorder %v1031, %v1058
      %vm1080 = vcmp.ge.f32.partialorder %v1032, %v1060
      %vm1081 = vcmp.ge.f32.partialorder %v1033, %v1062
      %vm1082 = vcmp.ge.f32.partialorder %v1034, %v1064
      %vm1083 = vcmp.ge.f32.partialorder %v1035, %v1066
      %vm1084 = vcmp.ge.f32.partialorder %v1036, %v1068
      %v1085 = vsel %vm1069, -1e+30, %v1021
      %v1086 = vsel %vm1070, -1e+30, %v1022
      %v1087 = vsel %vm1071, -1e+30, %v1023
      %v1088 = vsel %vm1072, -1e+30, %v1024
      %v1089 = vsel %vm1073, -1e+30, %v1025
      %v1090 = vsel %vm1074, -1e+30, %v1026
      %v1091 = vsel %vm1075, -1e+30, %v1027
      %v1092 = vsel %vm1076, -1e+30, %v1028
      %v1093 = vsel %vm1077, -1e+30, %v1029
      %v1094 = vsel %vm1078, -1e+30, %v1030
      %v1095 = vsel %vm1079, -1e+30, %v1031
      %v1096 = vsel %vm1080, -1e+30, %v1032
      %v1097 = vsel %vm1081, -1e+30, %v1033
      %v1098 = vsel %vm1082, -1e+30, %v1034
      %v1099 = vsel %vm1083, -1e+30, %v1035
      %v1100 = vsel %vm1084, -1e+30, %v1036
      %1101 = vmax.xlane.f32.xlu0 %v1085
      %v1102 = vpop.xlane.xlu0 %1101
      %1103 = vmax.xlane.f32.xlu0 %v1086
      %v1104 = vpop.xlane.xlu0 %1103
      %1105 = vmax.xlane.f32.xlu0 %v1087
      %v1106 = vpop.xlane.xlu0 %1105
      %1107 = vmax.xlane.f32.xlu0 %v1088
      %v1108 = vpop.xlane.xlu0 %1107
      %1109 = vmax.xlane.f32.xlu0 %v1089
      %v1110 = vpop.xlane.xlu0 %1109
      %1111 = vmax.xlane.f32.xlu0 %v1090
      %v1112 = vpop.xlane.xlu0 %1111
      %1113 = vmax.xlane.f32.xlu0 %v1091
      %v1114 = vpop.xlane.xlu0 %1113
      %1115 = vmax.xlane.f32.xlu0 %v1092
      %v1116 = vpop.xlane.xlu0 %1115
      %1117 = vmax.xlane.f32.xlu0 %v1093
      %v1118 = vpop.xlane.xlu0 %1117
      %1119 = vmax.xlane.f32.xlu0 %v1094
      %v1120 = vpop.xlane.xlu0 %1119
      %1121 = vmax.xlane.f32.xlu0 %v1095
      %v1122 = vpop.xlane.xlu0 %1121
      %1123 = vmax.xlane.f32.xlu0 %v1096
      %v1124 = vpop.xlane.xlu0 %1123
      %1125 = vmax.xlane.f32.xlu0 %v1097
      %v1126 = vpop.xlane.xlu0 %1125
      %1127 = vmax.xlane.f32.xlu0 %v1098
      %v1128 = vpop.xlane.xlu0 %1127
      %1129 = vmax.xlane.f32.xlu0 %v1099
      %v1130 = vpop.xlane.xlu0 %1129
      %1131 = vmax.xlane.f32.xlu0 %v1100
      %v1132 = vpop.xlane.xlu0 %1131
      %vm1133 = vcmp.ge.f32.partialorder %v637, %v1102
      %vm1134 = vcmp.ge.f32.partialorder %v638, %v1104
      %vm1135 = vcmp.ge.f32.partialorder %v639, %v1106
      %vm1136 = vcmp.ge.f32.partialorder %v640, %v1108
      %vm1137 = vcmp.ge.f32.partialorder %v641, %v1110
      %vm1138 = vcmp.ge.f32.partialorder %v642, %v1112
      %vm1139 = vcmp.ge.f32.partialorder %v643, %v1114
      %vm1140 = vcmp.ge.f32.partialorder %v644, %v1116
      %vm1141 = vcmp.ge.f32.partialorder %v645, %v1118
      %vm1142 = vcmp.ge.f32.partialorder %v646, %v1120
      %vm1143 = vcmp.ge.f32.partialorder %v647, %v1122
      %vm1144 = vcmp.ge.f32.partialorder %v648, %v1124
      %vm1145 = vcmp.ge.f32.partialorder %v649, %v1126
      %vm1146 = vcmp.ge.f32.partialorder %v650, %v1128
      %vm1147 = vcmp.ge.f32.partialorder %v651, %v1130
      %vm1148 = vcmp.ge.f32.partialorder %v652, %v1132
      %v1149 = vsel %vm1133, %v637, 0.0
      %v1150 = vsel %vm1134, %v638, 0.0
      %v1151 = vsel %vm1135, %v639, 0.0
      %v1152 = vsel %vm1136, %v640, 0.0
      %v1153 = vsel %vm1137, %v641, 0.0
      %v1154 = vsel %vm1138, %v642, 0.0
      %v1155 = vsel %vm1139, %v643, 0.0
      %v1156 = vsel %vm1140, %v644, 0.0
      %v1157 = vsel %vm1141, %v645, 0.0
      %v1158 = vsel %vm1142, %v646, 0.0
      %v1159 = vsel %vm1143, %v647, 0.0
      %v1160 = vsel %vm1144, %v648, 0.0
      %v1161 = vsel %vm1145, %v649, 0.0
      %v1162 = vsel %vm1146, %v650, 0.0
      %v1163 = vsel %vm1147, %v651, 0.0
      %v1164 = vsel %vm1148, %v652, 0.0
      %v1165 = vpack.c.bf16 %v1150, %v1149
      %v1166 = vpack.c.bf16 %v1152, %v1151
      %v1167 = vpack.c.bf16 %v1154, %v1153
      %v1168 = vpack.c.bf16 %v1156, %v1155
      %v1169 = vpack.c.bf16 %v1158, %v1157
      %v1170 = vpack.c.bf16 %v1160, %v1159
      %v1171 = vpack.c.bf16 %v1162, %v1161
      %v1172 = vpack.c.bf16 %v1164, %v1163
      %v1173 = vld [vmem:[%s4] sm:$0xf]
      %v1174 = vld [vmem:[%s4 + $0x4] sm:$0xf]
      %v1175 = vld [vmem:[%s4 + $0x8] sm:$0xf]
      %v1176 = vld [vmem:[%s4 + $0xc] sm:$0xf]
      %v1177 = vld [vmem:[%s4 + $0x10] sm:$0xf]
      %v1178 = vld [vmem:[%s4 + $0x14] sm:$0xf]
      %v1179 = vld [vmem:[%s4 + $0x18] sm:$0xf]
      %v1180 = vld [vmem:[%s4 + $0x1c] sm:$0xf]
      %v1181 = vld [vmem:[%s4 + $0x20] sm:$0xf]
      %v1182 = vld [vmem:[%s4 + $0x24] sm:$0xf]
      %v1183 = vld [vmem:[%s4 + $0x28] sm:$0xf]
      %v1184 = vld [vmem:[%s4 + $0x2c] sm:$0xf]
      %v1185 = vld [vmem:[%s4 + $0x30] sm:$0xf]
      %v1186 = vld [vmem:[%s4 + $0x34] sm:$0xf]
      %v1187 = vld [vmem:[%s4 + $0x38] sm:$0xf]
      %v1188 = vld [vmem:[%s4 + $0x3c] sm:$0xf]
      %v1205 = vunpack.c.l.b16 %v1173
      %v1206 = vunpack.c.l.b16 %v1174
      %v1207 = vunpack.c.l.b16 %v1175
      %v1208 = vunpack.c.l.b16 %v1176
      %v1209 = vunpack.c.l.b16 %v1177
      %v1210 = vunpack.c.l.b16 %v1178
      %v1211 = vunpack.c.l.b16 %v1179
      %v1212 = vunpack.c.l.b16 %v1180
      %v1213 = vunpack.c.l.b16 %v1181
      %v1214 = vunpack.c.l.b16 %v1182
      %v1215 = vunpack.c.l.b16 %v1183
      %v1216 = vunpack.c.l.b16 %v1184
      %v1217 = vunpack.c.l.b16 %v1185
      %v1218 = vunpack.c.l.b16 %v1186
      %v1219 = vunpack.c.l.b16 %v1187
      %v1220 = vunpack.c.l.b16 %v1188
      %v1221 = vpack.c.b16 %v1206, %v1205
      %v1222 = vpack.c.b16 %v1208, %v1207
      %v1223 = vpack.c.b16 %v1210, %v1209
      %v1224 = vpack.c.b16 %v1212, %v1211
      %v1225 = vpack.c.b16 %v1214, %v1213
      %v1226 = vpack.c.b16 %v1216, %v1215
      %v1227 = vpack.c.b16 %v1218, %v1217
      %v1228 = vpack.c.b16 %v1220, %v1219
      %1237 = vmatpush.bf16.msra.mxu0 %v1228
      %1238 = vmatpush.bf16.msra.mxu0 %v1227
      %1239 = vmatpush.bf16.msra.mxu0 %v1226
      %1240 = vmatpush.bf16.msra.mxu0 %v1225
      %1241 = vmatpush.bf16.msra.mxu0 %v1224
      %1242 = vmatpush.bf16.msra.mxu0 %v1223
      %1243 = vmatpush.bf16.msra.mxu0 %v1222
      %1244 = vmatpush.bf16.msra.mxu0 %v1221
      %1245 = vmatmul.bf16.gmra.mxu0 %v1165
      %v1246 = vpop.f32.mrf.mxu0
      %v1247 = vadd.f32 %v517, %v1246
      %v1248 = vpop.f32.mrf.mxu0
      %v1249 = vadd.f32 %v517, %v1248
      %1250 = vmatmul.bf16.gmra.mxu0 %v1166
      %v1251 = vpop.f32.mrf.mxu0
      %v1252 = vadd.f32 %v517, %v1251
      %v1253 = vpop.f32.mrf.mxu0
      %v1254 = vadd.f32 %v517, %v1253
      %1255 = vmatmul.bf16.gmra.mxu0 %v1167
      %v1256 = vpop.f32.mrf.mxu0
      %v1257 = vadd.f32 %v517, %v1256
      %v1258 = vpop.f32.mrf.mxu0
      %v1259 = vadd.f32 %v517, %v1258
      %1260 = vmatmul.bf16.gmra.mxu0 %v1168
      %v1261 = vpop.f32.mrf.mxu0
      %v1262 = vadd.f32 %v517, %v1261
      %v1263 = vpop.f32.mrf.mxu0
      %v1264 = vadd.f32 %v517, %v1263
      %1265 = vmatmul.bf16.gmra.mxu0 %v1169
      %v1266 = vpop.f32.mrf.mxu0
      %v1267 = vadd.f32 %v517, %v1266
      %v1268 = vpop.f32.mrf.mxu0
      %v1269 = vadd.f32 %v517, %v1268
      %1270 = vmatmul.bf16.gmra.mxu0 %v1170
      %v1271 = vpop.f32.mrf.mxu0
      %v1272 = vadd.f32 %v517, %v1271
      %v1273 = vpop.f32.mrf.mxu0
      %v1274 = vadd.f32 %v517, %v1273
      %1275 = vmatmul.bf16.gmra.mxu0 %v1171
      %v1276 = vpop.f32.mrf.mxu0
      %v1277 = vadd.f32 %v517, %v1276
      %v1278 = vpop.f32.mrf.mxu0
      %v1279 = vadd.f32 %v517, %v1278
      %1280 = vmatmul.bf16.gmra.mxu0 %v1172
      %v1281 = vpop.f32.mrf.mxu0
      %v1282 = vadd.f32 %v517, %v1281
      %v1283 = vpop.f32.mrf.mxu0
      %v1284 = vadd.f32 %v517, %v1283
      %1285 = vdwg.mxu0
      %v1286 = vpack.c.bf16 %v500, %v499
      %v1287 = vpack.c.bf16 %v502, %v501
      %v1288 = vpack.c.bf16 %v504, %v503
      %v1289 = vpack.c.bf16 %v506, %v505
      %v1290 = vpack.c.bf16 %v508, %v507
      %v1291 = vpack.c.bf16 %v510, %v509
      %v1292 = vpack.c.bf16 %v512, %v511
      %v1293 = vpack.c.bf16 %v514, %v513
      %v1294 = vpack.c.bf16 %v1249, %v1247
      %v1295 = vpack.c.bf16 %v1254, %v1252
      %v1296 = vpack.c.bf16 %v1259, %v1257
      %v1297 = vpack.c.bf16 %v1264, %v1262
      %v1298 = vpack.c.bf16 %v1269, %v1267
      %v1299 = vpack.c.bf16 %v1274, %v1272
      %v1300 = vpack.c.bf16 %v1279, %v1277
      %v1301 = vpack.c.bf16 %v1284, %v1282
      %v1302 = vld [vmem:[%s6] sm:$0xf]
      %v1303 = vld [vmem:[%s6 + $0x4] sm:$0xf]
      %v1304 = vld [vmem:[%s6 + $0x8] sm:$0xf]
      %v1305 = vld [vmem:[%s6 + $0xc] sm:$0xf]
      %v1306 = vld [vmem:[%s9] sm:$0x1]
      %v1308 = vperm.slane %v1306, 0
      %v1314 = vunpack.c.l.b16 %v1302
      %v1315 = vunpack.c.l.b16 %v1303
      %v1316 = vunpack.c.l.b16 %v1304
      %v1317 = vunpack.c.l.b16 %v1305
      %v1318 = vpack.c.b16 %v1315, %v1314
      %v1319 = vpack.c.b16 %v1317, %v1316
      %v1323 = vsel %vm563, %v1286, 0
      %v1326 = vsel %vm563, %v1287, 0
      %v1329 = vsel %vm563, %v1288, 0
      %v1332 = vsel %vm563, %v1289, 0
      %v1335 = vsel %vm563, %v1290, 0
      %v1338 = vsel %vm563, %v1291, 0
      %v1341 = vsel %vm563, %v1292, 0
      %v1344 = vsel %vm563, %v1293, 0
      %v1347 = vsel %vm563, %v1294, 0
      %v1350 = vsel %vm563, %v1295, 0
      %v1353 = vsel %vm563, %v1296, 0
      %v1356 = vsel %vm563, %v1297, 0
      %v1359 = vsel %vm563, %v1298, 0
      %v1362 = vsel %vm563, %v1299, 0
      %v1365 = vsel %vm563, %v1300, 0
      %v1368 = vsel %vm563, %v1301, 0
      %1370 = vmatpush.bf16.msra.mxu0 0
      %1371 = vmatpush.bf16.msra.mxu0 0
      %1372 = vmatpush.bf16.msra.mxu0 0
      %1373 = vmatpush.bf16.msra.mxu0 0
      %1374 = vmatpush.bf16.msra.mxu0 0
      %1375 = vmatpush.bf16.msra.mxu0 0
      %1376 = vmatpush.bf16.msra.mxu0 %v1319
      %1377 = vmatpush.bf16.msra.mxu0 %v1318
      %1378 = vmatmul.bf16.gmra.mxu0 %v1323
      %v1379 = vpop.f32.mrf.mxu0
      %v1380 = vadd.f32 %v1308, %v1379
      %v1381 = vpop.f32.mrf.mxu0
      %v1382 = vadd.f32 %v1308, %v1381
      %1383 = vmatmul.bf16.gmra.mxu0 %v1326
      %v1384 = vpop.f32.mrf.mxu0
      %v1385 = vadd.f32 %v1308, %v1384
      %v1386 = vpop.f32.mrf.mxu0
      %v1387 = vadd.f32 %v1308, %v1386
      %1388 = vmatmul.bf16.gmra.mxu0 %v1329
      %v1389 = vpop.f32.mrf.mxu0
      %v1390 = vadd.f32 %v1308, %v1389
      %v1391 = vpop.f32.mrf.mxu0
      %v1392 = vadd.f32 %v1308, %v1391
      %1393 = vmatmul.bf16.gmra.mxu0 %v1332
      %v1394 = vpop.f32.mrf.mxu0
      %v1395 = vadd.f32 %v1308, %v1394
      %v1396 = vpop.f32.mrf.mxu0
      %v1397 = vadd.f32 %v1308, %v1396
      %1398 = vmatmul.bf16.gmra.mxu0 %v1335
      %v1399 = vpop.f32.mrf.mxu0
      %v1400 = vadd.f32 %v1308, %v1399
      %v1401 = vpop.f32.mrf.mxu0
      %v1402 = vadd.f32 %v1308, %v1401
      %1403 = vmatmul.bf16.gmra.mxu0 %v1338
      %v1404 = vpop.f32.mrf.mxu0
      %v1405 = vadd.f32 %v1308, %v1404
      %v1406 = vpop.f32.mrf.mxu0
      %v1407 = vadd.f32 %v1308, %v1406
      %1408 = vmatmul.bf16.gmra.mxu0 %v1341
      %v1409 = vpop.f32.mrf.mxu0
      %v1410 = vadd.f32 %v1308, %v1409
      %v1411 = vpop.f32.mrf.mxu0
      %v1412 = vadd.f32 %v1308, %v1411
      %1413 = vmatmul.bf16.gmra.mxu0 %v1344
      %v1414 = vpop.f32.mrf.mxu0
      %v1415 = vadd.f32 %v1308, %v1414
      %v1416 = vpop.f32.mrf.mxu0
      %v1417 = vadd.f32 %v1308, %v1416
      %1418 = vmatmul.bf16.gmra.mxu0 %v1347
      %v1419 = vpop.f32.mrf.mxu0
      %v1420 = vadd.f32 %v1308, %v1419
      %v1421 = vpop.f32.mrf.mxu0
      %v1422 = vadd.f32 %v1308, %v1421
      %1423 = vmatmul.bf16.gmra.mxu0 %v1350
      %v1424 = vpop.f32.mrf.mxu0
      %v1425 = vadd.f32 %v1308, %v1424
      %v1426 = vpop.f32.mrf.mxu0
      %v1427 = vadd.f32 %v1308, %v1426
      %1428 = vmatmul.bf16.gmra.mxu0 %v1353
      %v1429 = vpop.f32.mrf.mxu0
      %v1430 = vadd.f32 %v1308, %v1429
      %v1431 = vpop.f32.mrf.mxu0
      %v1432 = vadd.f32 %v1308, %v1431
      %1433 = vmatmul.bf16.gmra.mxu0 %v1356
      %v1434 = vpop.f32.mrf.mxu0
      %v1435 = vadd.f32 %v1308, %v1434
      %v1436 = vpop.f32.mrf.mxu0
      %v1437 = vadd.f32 %v1308, %v1436
      %1438 = vmatmul.bf16.gmra.mxu0 %v1359
      %v1439 = vpop.f32.mrf.mxu0
      %v1440 = vadd.f32 %v1308, %v1439
      %v1441 = vpop.f32.mrf.mxu0
      %v1442 = vadd.f32 %v1308, %v1441
      %1443 = vmatmul.bf16.gmra.mxu0 %v1362
      %v1444 = vpop.f32.mrf.mxu0
      %v1445 = vadd.f32 %v1308, %v1444
      %v1446 = vpop.f32.mrf.mxu0
      %v1447 = vadd.f32 %v1308, %v1446
      %1448 = vmatmul.bf16.gmra.mxu0 %v1365
      %v1449 = vpop.f32.mrf.mxu0
      %v1450 = vadd.f32 %v1308, %v1449
      %v1451 = vpop.f32.mrf.mxu0
      %v1452 = vadd.f32 %v1308, %v1451
      %1453 = vmatmul.bf16.gmra.mxu0 %v1368
      %v1454 = vpop.f32.mrf.mxu0
      %v1455 = vadd.f32 %v1308, %v1454
      %v1456 = vpop.f32.mrf.mxu0
      %v1457 = vadd.f32 %v1308, %v1456
      %1458 = vdwg.mxu0
      %v1459 = vld [vmem:[%s7] sm:$0xf]
      %v1460 = vld [vmem:[%s7 + $0x4] sm:$0xf]
      %v1461 = vld [vmem:[%s7 + $0x8] sm:$0xf]
      %v1462 = vld [vmem:[%s7 + $0xc] sm:$0xf]
      %v1463 = vld [vmem:[%s10] sm:$0x1]
      %v1465 = vperm.slane %v1463, 0
      %v1471 = vunpack.c.l.b16 %v1459
      %v1472 = vunpack.c.l.b16 %v1460
      %v1473 = vunpack.c.l.b16 %v1461
      %v1474 = vunpack.c.l.b16 %v1462
      %v1475 = vpack.c.b16 %v1472, %v1471
      %v1476 = vpack.c.b16 %v1474, %v1473
      %1479 = vmatpush.bf16.msra.mxu0 0
      %1480 = vmatpush.bf16.msra.mxu0 0
      %1481 = vmatpush.bf16.msra.mxu0 0
      %1482 = vmatpush.bf16.msra.mxu0 0
      %1483 = vmatpush.bf16.msra.mxu0 0
      %1484 = vmatpush.bf16.msra.mxu0 0
      %1485 = vmatpush.bf16.msra.mxu0 %v1476
      %1486 = vmatpush.bf16.msra.mxu0 %v1475
      %1487 = vmatmul.bf16.gmra.mxu0 %v1323
      %v1488 = vpop.f32.mrf.mxu0
      %v1489 = vadd.f32 %v1465, %v1488
      %v1490 = vpop.f32.mrf.mxu0
      %v1491 = vadd.f32 %v1465, %v1490
      %1492 = vmatmul.bf16.gmra.mxu0 %v1326
      %v1493 = vpop.f32.mrf.mxu0
      %v1494 = vadd.f32 %v1465, %v1493
      %v1495 = vpop.f32.mrf.mxu0
      %v1496 = vadd.f32 %v1465, %v1495
      %1497 = vmatmul.bf16.gmra.mxu0 %v1329
      %v1498 = vpop.f32.mrf.mxu0
      %v1499 = vadd.f32 %v1465, %v1498
      %v1500 = vpop.f32.mrf.mxu0
      %v1501 = vadd.f32 %v1465, %v1500
      %1502 = vmatmul.bf16.gmra.mxu0 %v1332
      %v1503 = vpop.f32.mrf.mxu0
      %v1504 = vadd.f32 %v1465, %v1503
      %v1505 = vpop.f32.mrf.mxu0
      %v1506 = vadd.f32 %v1465, %v1505
      %1507 = vmatmul.bf16.gmra.mxu0 %v1335
      %v1508 = vpop.f32.mrf.mxu0
      %v1509 = vadd.f32 %v1465, %v1508
      %v1510 = vpop.f32.mrf.mxu0
      %v1511 = vadd.f32 %v1465, %v1510
      %1512 = vmatmul.bf16.gmra.mxu0 %v1338
      %v1513 = vpop.f32.mrf.mxu0
      %v1514 = vadd.f32 %v1465, %v1513
      %v1515 = vpop.f32.mrf.mxu0
      %v1516 = vadd.f32 %v1465, %v1515
      %1517 = vmatmul.bf16.gmra.mxu0 %v1341
      %v1518 = vpop.f32.mrf.mxu0
      %v1519 = vadd.f32 %v1465, %v1518
      %v1520 = vpop.f32.mrf.mxu0
      %v1521 = vadd.f32 %v1465, %v1520
      %1522 = vmatmul.bf16.gmra.mxu0 %v1344
      %v1523 = vpop.f32.mrf.mxu0
      %v1524 = vadd.f32 %v1465, %v1523
      %v1525 = vpop.f32.mrf.mxu0
      %v1526 = vadd.f32 %v1465, %v1525
      %1527 = vmatmul.bf16.gmra.mxu0 %v1347
      %v1528 = vpop.f32.mrf.mxu0
      %v1529 = vadd.f32 %v1465, %v1528
      %v1530 = vpop.f32.mrf.mxu0
      %v1531 = vadd.f32 %v1465, %v1530
      %1532 = vmatmul.bf16.gmra.mxu0 %v1350
      %v1533 = vpop.f32.mrf.mxu0
      %v1534 = vadd.f32 %v1465, %v1533
      %v1535 = vpop.f32.mrf.mxu0
      %v1536 = vadd.f32 %v1465, %v1535
      %1537 = vmatmul.bf16.gmra.mxu0 %v1353
      %v1538 = vpop.f32.mrf.mxu0
      %v1539 = vadd.f32 %v1465, %v1538
      %v1540 = vpop.f32.mrf.mxu0
      %v1541 = vadd.f32 %v1465, %v1540
      %1542 = vmatmul.bf16.gmra.mxu0 %v1356
      %v1543 = vpop.f32.mrf.mxu0
      %v1544 = vadd.f32 %v1465, %v1543
      %v1545 = vpop.f32.mrf.mxu0
      %v1546 = vadd.f32 %v1465, %v1545
      %1547 = vmatmul.bf16.gmra.mxu0 %v1359
      %v1548 = vpop.f32.mrf.mxu0
      %v1549 = vadd.f32 %v1465, %v1548
      %v1550 = vpop.f32.mrf.mxu0
      %v1551 = vadd.f32 %v1465, %v1550
      %1552 = vmatmul.bf16.gmra.mxu0 %v1362
      %v1553 = vpop.f32.mrf.mxu0
      %v1554 = vadd.f32 %v1465, %v1553
      %v1555 = vpop.f32.mrf.mxu0
      %v1556 = vadd.f32 %v1465, %v1555
      %1557 = vmatmul.bf16.gmra.mxu0 %v1365
      %v1558 = vpop.f32.mrf.mxu0
      %v1559 = vadd.f32 %v1465, %v1558
      %v1560 = vpop.f32.mrf.mxu0
      %v1561 = vadd.f32 %v1465, %v1560
      %1562 = vmatmul.bf16.gmra.mxu0 %v1368
      %v1563 = vpop.f32.mrf.mxu0
      %v1564 = vadd.f32 %v1465, %v1563
      %v1565 = vpop.f32.mrf.mxu0
      %v1566 = vadd.f32 %v1465, %v1565
      %1567 = vdwg.mxu0
      %v1568 = vld [vmem:[%s5] sm:$0xf]
      %v1569 = vld [vmem:[%s5 + $0x4] sm:$0xf]
      %v1570 = vld [vmem:[%s5 + $0x8] sm:$0xf]
      %v1571 = vld [vmem:[%s5 + $0xc] sm:$0xf]
      %v1572 = vld [vmem:[%s8] sm:$0x1]
      %v1574 = vperm.slane %v1572, 0
      %v1580 = vunpack.c.l.b16 %v1568
      %v1581 = vunpack.c.l.b16 %v1569
      %v1582 = vunpack.c.l.b16 %v1570
      %v1583 = vunpack.c.l.b16 %v1571
      %v1584 = vpack.c.b16 %v1581, %v1580
      %v1585 = vpack.c.b16 %v1583, %v1582
      %1588 = vmatpush.bf16.msra.mxu0 0
      %1589 = vmatpush.bf16.msra.mxu0 0
      %1590 = vmatpush.bf16.msra.mxu0 0
      %1591 = vmatpush.bf16.msra.mxu0 0
      %1592 = vmatpush.bf16.msra.mxu0 0
      %1593 = vmatpush.bf16.msra.mxu0 0
      %1594 = vmatpush.bf16.msra.mxu0 %v1585
      %1595 = vmatpush.bf16.msra.mxu0 %v1584
      %1596 = vmatmul.bf16.gmra.mxu0 %v1347
      %v1597 = vpop.f32.mrf.mxu0
      %v1598 = vadd.f32 %v1574, %v1597
      %v1599 = vpop.f32.mrf.mxu0
      %v1600 = vadd.f32 %v1574, %v1599
      %1601 = vmatmul.bf16.gmra.mxu0 %v1350
      %v1602 = vpop.f32.mrf.mxu0
      %v1603 = vadd.f32 %v1574, %v1602
      %v1604 = vpop.f32.mrf.mxu0
      %v1605 = vadd.f32 %v1574, %v1604
      %1606 = vmatmul.bf16.gmra.mxu0 %v1353
      %v1607 = vpop.f32.mrf.mxu0
      %v1608 = vadd.f32 %v1574, %v1607
      %v1609 = vpop.f32.mrf.mxu0
      %v1610 = vadd.f32 %v1574, %v1609
      %1611 = vmatmul.bf16.gmra.mxu0 %v1356
      %v1612 = vpop.f32.mrf.mxu0
      %v1613 = vadd.f32 %v1574, %v1612
      %v1614 = vpop.f32.mrf.mxu0
      %v1615 = vadd.f32 %v1574, %v1614
      %1616 = vmatmul.bf16.gmra.mxu0 %v1359
      %v1617 = vpop.f32.mrf.mxu0
      %v1618 = vadd.f32 %v1574, %v1617
      %v1619 = vpop.f32.mrf.mxu0
      %v1620 = vadd.f32 %v1574, %v1619
      %1621 = vmatmul.bf16.gmra.mxu0 %v1362
      %v1622 = vpop.f32.mrf.mxu0
      %v1623 = vadd.f32 %v1574, %v1622
      %v1624 = vpop.f32.mrf.mxu0
      %v1625 = vadd.f32 %v1574, %v1624
      %1626 = vmatmul.bf16.gmra.mxu0 %v1365
      %v1627 = vpop.f32.mrf.mxu0
      %v1628 = vadd.f32 %v1574, %v1627
      %v1629 = vpop.f32.mrf.mxu0
      %v1630 = vadd.f32 %v1574, %v1629
      %1631 = vmatmul.bf16.gmra.mxu0 %v1368
      %v1632 = vpop.f32.mrf.mxu0
      %v1633 = vadd.f32 %v1574, %v1632
      %v1634 = vpop.f32.mrf.mxu0
      %v1635 = vadd.f32 %v1574, %v1634
      %1636 = vdwg.mxu0
      %v1637 = vld [vmem:[%s13] sm:$0xff]
      %v1638 = vld [vmem:[%s13 + $0x8] sm:$0xff]
      %v1639 = vld [vmem:[%s13 + $0x10] sm:$0xff]
      %v1640 = vld [vmem:[%s13 + $0x18] sm:$0xff]
      %v1641 = vmul.f32 %v1598, %v1380
      %v1642 = vmul.f32 %v1600, %v1382
      %v1643 = vmul.f32 %v1603, %v1385
      %v1644 = vmul.f32 %v1605, %v1387
      %v1645 = vmul.f32 %v1608, %v1390
      %v1646 = vmul.f32 %v1610, %v1392
      %v1647 = vmul.f32 %v1613, %v1395
      %v1648 = vmul.f32 %v1615, %v1397
      %v1649 = vmul.f32 %v1618, %v1400
      %v1650 = vmul.f32 %v1620, %v1402
      %v1651 = vmul.f32 %v1623, %v1405
      %v1652 = vmul.f32 %v1625, %v1407
      %v1653 = vmul.f32 %v1628, %v1410
      %v1654 = vmul.f32 %v1630, %v1412
      %v1655 = vmul.f32 %v1633, %v1415
      %v1656 = vmul.f32 %v1635, %v1417
      %v1658 = vsel %vm563, %v1641, 0
      %v1661 = vsel %vm563, %v1642, 0
      %v1664 = vsel %vm563, %v1643, 0
      %v1667 = vsel %vm563, %v1644, 0
      %v1670 = vsel %vm563, %v1645, 0
      %v1673 = vsel %vm563, %v1646, 0
      %v1676 = vsel %vm563, %v1647, 0
      %v1679 = vsel %vm563, %v1648, 0
      %v1682 = vsel %vm563, %v1649, 0
      %v1685 = vsel %vm563, %v1650, 0
      %v1688 = vsel %vm563, %v1651, 0
      %v1691 = vsel %vm563, %v1652, 0
      %v1694 = vsel %vm563, %v1653, 0
      %v1697 = vsel %vm563, %v1654, 0
      %v1700 = vsel %vm563, %v1655, 0
      %v1703 = vsel %vm563, %v1656, 0
      %1705 = vmatpush.msra.mxu0 0.0
      %1706 = vmatpush.msra.mxu0 0.0
      %1707 = vmatpush.msra.mxu0 0.0
      %1708 = vmatpush.msra.mxu0 0.0
      %1709 = vmatpush.msra.mxu0 0.0
      %1710 = vmatpush.msra.mxu0 0.0
      %1711 = vmatpush.msra.mxu0 0.0
      %1712 = vmatpush.msra.mxu0 0.0
      %1713 = vmatpush.msra.mxu0 0.0
      %1714 = vmatpush.msra.mxu0 0.0
      %1715 = vmatpush.msra.mxu0 0.0
      %1716 = vmatpush.msra.mxu0 0.0
      %1717 = vmatpush.msra.mxu0 %v1640
      %1718 = vmatpush.msra.mxu0 %v1639
      %1719 = vmatpush.msra.mxu0 %v1638
      %1720 = vmatpush.msra.mxu0 %v1637
      %1721 = vmatmul.f32.gmra.mxu0 %v1658
      %v1722 = vpop.f32.mrf.mxu0
      %v1723 = vadd.f32 0.0, %v1722
      %1724 = vmatmul.f32.gmra.mxu0 %v1661
      %v1725 = vpop.f32.mrf.mxu0
      %v1726 = vadd.f32 0.0, %v1725
      %1727 = vmatmul.f32.gmra.mxu0 %v1664
      %v1728 = vpop.f32.mrf.mxu0
      %v1729 = vadd.f32 0.0, %v1728
      %1730 = vmatmul.f32.gmra.mxu0 %v1667
      %v1731 = vpop.f32.mrf.mxu0
      %v1732 = vadd.f32 0.0, %v1731
      %1733 = vmatmul.f32.gmra.mxu0 %v1670
      %v1734 = vpop.f32.mrf.mxu0
      %v1735 = vadd.f32 0.0, %v1734
      %1736 = vmatmul.f32.gmra.mxu0 %v1673
      %v1737 = vpop.f32.mrf.mxu0
      %v1738 = vadd.f32 0.0, %v1737
      %1739 = vmatmul.f32.gmra.mxu0 %v1676
      %v1740 = vpop.f32.mrf.mxu0
      %v1741 = vadd.f32 0.0, %v1740
      %1742 = vmatmul.f32.gmra.mxu0 %v1679
      %v1743 = vpop.f32.mrf.mxu0
      %v1744 = vadd.f32 0.0, %v1743
      %1745 = vmatmul.f32.gmra.mxu0 %v1682
      %v1746 = vpop.f32.mrf.mxu0
      %v1747 = vadd.f32 0.0, %v1746
      %1748 = vmatmul.f32.gmra.mxu0 %v1685
      %v1749 = vpop.f32.mrf.mxu0
      %v1750 = vadd.f32 0.0, %v1749
      %1751 = vmatmul.f32.gmra.mxu0 %v1688
      %v1752 = vpop.f32.mrf.mxu0
      %v1753 = vadd.f32 0.0, %v1752
      %1754 = vmatmul.f32.gmra.mxu0 %v1691
      %v1755 = vpop.f32.mrf.mxu0
      %v1756 = vadd.f32 0.0, %v1755
      %1757 = vmatmul.f32.gmra.mxu0 %v1694
      %v1758 = vpop.f32.mrf.mxu0
      %v1759 = vadd.f32 0.0, %v1758
      %1760 = vmatmul.f32.gmra.mxu0 %v1697
      %v1761 = vpop.f32.mrf.mxu0
      %v1762 = vadd.f32 0.0, %v1761
      %1763 = vmatmul.f32.gmra.mxu0 %v1700
      %v1764 = vpop.f32.mrf.mxu0
      %v1765 = vadd.f32 0.0, %v1764
      %1766 = vmatmul.f32.gmra.mxu0 %v1703
      %v1767 = vpop.f32.mrf.mxu0
      %v1768 = vadd.f32 0.0, %v1767
      %1769 = vdwg.mxu0
      %v1770 = vmul.f32 %v1598, %v1420
      %v1771 = vmul.f32 %v1600, %v1422
      %v1772 = vmul.f32 %v1603, %v1425
      %v1773 = vmul.f32 %v1605, %v1427
      %v1774 = vmul.f32 %v1608, %v1430
      %v1775 = vmul.f32 %v1610, %v1432
      %v1776 = vmul.f32 %v1613, %v1435
      %v1777 = vmul.f32 %v1615, %v1437
      %v1778 = vmul.f32 %v1618, %v1440
      %v1779 = vmul.f32 %v1620, %v1442
      %v1780 = vmul.f32 %v1623, %v1445
      %v1781 = vmul.f32 %v1625, %v1447
      %v1782 = vmul.f32 %v1628, %v1450
      %v1783 = vmul.f32 %v1630, %v1452
      %v1784 = vmul.f32 %v1633, %v1455
      %v1785 = vmul.f32 %v1635, %v1457
      %v1787 = vsel %vm563, %v1770, 0
      %v1790 = vsel %vm563, %v1771, 0
      %v1793 = vsel %vm563, %v1772, 0
      %v1796 = vsel %vm563, %v1773, 0
      %v1799 = vsel %vm563, %v1774, 0
      %v1802 = vsel %vm563, %v1775, 0
      %v1805 = vsel %vm563, %v1776, 0
      %v1808 = vsel %vm563, %v1777, 0
      %v1811 = vsel %vm563, %v1778, 0
      %v1814 = vsel %vm563, %v1779, 0
      %v1817 = vsel %vm563, %v1780, 0
      %v1820 = vsel %vm563, %v1781, 0
      %v1823 = vsel %vm563, %v1782, 0
      %v1826 = vsel %vm563, %v1783, 0
      %v1829 = vsel %vm563, %v1784, 0
      %v1832 = vsel %vm563, %v1785, 0
      %1834 = vmatpush.msra.mxu0 0.0
      %1835 = vmatpush.msra.mxu0 0.0
      %1836 = vmatpush.msra.mxu0 0.0
      %1837 = vmatpush.msra.mxu0 0.0
      %1838 = vmatpush.msra.mxu0 0.0
      %1839 = vmatpush.msra.mxu0 0.0
      %1840 = vmatpush.msra.mxu0 0.0
      %1841 = vmatpush.msra.mxu0 0.0
      %1842 = vmatpush.msra.mxu0 0.0
      %1843 = vmatpush.msra.mxu0 0.0
      %1844 = vmatpush.msra.mxu0 0.0
      %1845 = vmatpush.msra.mxu0 0.0
      %1846 = vmatpush.msra.mxu0 %v1640
      %1847 = vmatpush.msra.mxu0 %v1639
      %1848 = vmatpush.msra.mxu0 %v1638
      %1849 = vmatpush.msra.mxu0 %v1637
      %1850 = vmatmul.f32.gmra.mxu0 %v1787
      %v1851 = vpop.f32.mrf.mxu0
      %v1852 = vadd.f32 0.0, %v1851
      %1853 = vmatmul.f32.gmra.mxu0 %v1790
      %v1854 = vpop.f32.mrf.mxu0
      %v1855 = vadd.f32 0.0, %v1854
      %1856 = vmatmul.f32.gmra.mxu0 %v1793
      %v1857 = vpop.f32.mrf.mxu0
      %v1858 = vadd.f32 0.0, %v1857
      %1859 = vmatmul.f32.gmra.mxu0 %v1796
      %v1860 = vpop.f32.mrf.mxu0
      %v1861 = vadd.f32 0.0, %v1860
      %1862 = vmatmul.f32.gmra.mxu0 %v1799
      %v1863 = vpop.f32.mrf.mxu0
      %v1864 = vadd.f32 0.0, %v1863
      %1865 = vmatmul.f32.gmra.mxu0 %v1802
      %v1866 = vpop.f32.mrf.mxu0
      %v1867 = vadd.f32 0.0, %v1866
      %1868 = vmatmul.f32.gmra.mxu0 %v1805
      %v1869 = vpop.f32.mrf.mxu0
      %v1870 = vadd.f32 0.0, %v1869
      %1871 = vmatmul.f32.gmra.mxu0 %v1808
      %v1872 = vpop.f32.mrf.mxu0
      %v1873 = vadd.f32 0.0, %v1872
      %1874 = vmatmul.f32.gmra.mxu0 %v1811
      %v1875 = vpop.f32.mrf.mxu0
      %v1876 = vadd.f32 0.0, %v1875
      %1877 = vmatmul.f32.gmra.mxu0 %v1814
      %v1878 = vpop.f32.mrf.mxu0
      %v1879 = vadd.f32 0.0, %v1878
      %1880 = vmatmul.f32.gmra.mxu0 %v1817
      %v1881 = vpop.f32.mrf.mxu0
      %v1882 = vadd.f32 0.0, %v1881
      %1883 = vmatmul.f32.gmra.mxu0 %v1820
      %v1884 = vpop.f32.mrf.mxu0
      %v1885 = vadd.f32 0.0, %v1884
      %1886 = vmatmul.f32.gmra.mxu0 %v1823
      %v1887 = vpop.f32.mrf.mxu0
      %v1888 = vadd.f32 0.0, %v1887
      %1889 = vmatmul.f32.gmra.mxu0 %v1826
      %v1890 = vpop.f32.mrf.mxu0
      %v1891 = vadd.f32 0.0, %v1890
      %1892 = vmatmul.f32.gmra.mxu0 %v1829
      %v1893 = vpop.f32.mrf.mxu0
      %v1894 = vadd.f32 0.0, %v1893
      %1895 = vmatmul.f32.gmra.mxu0 %v1832
      %v1896 = vpop.f32.mrf.mxu0
      %v1897 = vadd.f32 0.0, %v1896
      %1898 = vdwg.mxu0
      %v1899 = vmax.f32 %v1723, %v1852
      %v1900 = vmax.f32 %v1726, %v1855
      %v1901 = vmax.f32 %v1729, %v1858
      %v1902 = vmax.f32 %v1732, %v1861
      %v1903 = vmax.f32 %v1735, %v1864
      %v1904 = vmax.f32 %v1738, %v1867
      %v1905 = vmax.f32 %v1741, %v1870
      %v1906 = vmax.f32 %v1744, %v1873
      %v1907 = vmax.f32 %v1747, %v1876
      %v1908 = vmax.f32 %v1750, %v1879
      %v1909 = vmax.f32 %v1753, %v1882
      %v1910 = vmax.f32 %v1756, %v1885
      %v1911 = vmax.f32 %v1759, %v1888
      %v1912 = vmax.f32 %v1762, %v1891
      %v1913 = vmax.f32 %v1765, %v1894
      %v1914 = vmax.f32 %v1768, %v1897
      %v1915 = vsub.f32 %v1723, %v1899
      %v1916 = vsub.f32 %v1726, %v1900
      %v1917 = vsub.f32 %v1729, %v1901
      %v1918 = vsub.f32 %v1732, %v1902
      %v1919 = vsub.f32 %v1735, %v1903
      %v1920 = vsub.f32 %v1738, %v1904
      %v1921 = vsub.f32 %v1741, %v1905
      %v1922 = vsub.f32 %v1744, %v1906
      %v1923 = vsub.f32 %v1747, %v1907
      %v1924 = vsub.f32 %v1750, %v1908
      %v1925 = vsub.f32 %v1753, %v1909
      %v1926 = vsub.f32 %v1756, %v1910
      %v1927 = vsub.f32 %v1759, %v1911
      %v1928 = vsub.f32 %v1762, %v1912
      %v1929 = vsub.f32 %v1765, %v1913
      %v1930 = vsub.f32 %v1768, %v1914
      %v1931 = vmul.f32 %v1915, 1.442695
      %v1932 = vpow.pop %v1931
      %v1933 = vmul.f32 %v1916, 1.442695
      %v1934 = vpow.pop %v1933
      %v1935 = vmul.f32 %v1917, 1.442695
      %v1936 = vpow.pop %v1935
      %v1937 = vmul.f32 %v1918, 1.442695
      %v1938 = vpow.pop %v1937
      %v1939 = vmul.f32 %v1919, 1.442695
      %v1940 = vpow.pop %v1939
      %v1941 = vmul.f32 %v1920, 1.442695
      %v1942 = vpow.pop %v1941
      %v1943 = vmul.f32 %v1921, 1.442695
      %v1944 = vpow.pop %v1943
      %v1945 = vmul.f32 %v1922, 1.442695
      %v1946 = vpow.pop %v1945
      %v1947 = vmul.f32 %v1923, 1.442695
      %v1948 = vpow.pop %v1947
      %v1949 = vmul.f32 %v1924, 1.442695
      %v1950 = vpow.pop %v1949
      %v1951 = vmul.f32 %v1925, 1.442695
      %v1952 = vpow.pop %v1951
      %v1953 = vmul.f32 %v1926, 1.442695
      %v1954 = vpow.pop %v1953
      %v1955 = vmul.f32 %v1927, 1.442695
      %v1956 = vpow.pop %v1955
      %v1957 = vmul.f32 %v1928, 1.442695
      %v1958 = vpow.pop %v1957
      %v1959 = vmul.f32 %v1929, 1.442695
      %v1960 = vpow.pop %v1959
      %v1961 = vmul.f32 %v1930, 1.442695
      %v1962 = vpow.pop %v1961
      %v1963 = vsub.f32 %v1852, %v1899
      %v1964 = vsub.f32 %v1855, %v1900
      %v1965 = vsub.f32 %v1858, %v1901
      %v1966 = vsub.f32 %v1861, %v1902
      %v1967 = vsub.f32 %v1864, %v1903
      %v1968 = vsub.f32 %v1867, %v1904
      %v1969 = vsub.f32 %v1870, %v1905
      %v1970 = vsub.f32 %v1873, %v1906
      %v1971 = vsub.f32 %v1876, %v1907
      %v1972 = vsub.f32 %v1879, %v1908
      %v1973 = vsub.f32 %v1882, %v1909
      %v1974 = vsub.f32 %v1885, %v1910
      %v1975 = vsub.f32 %v1888, %v1911
      %v1976 = vsub.f32 %v1891, %v1912
      %v1977 = vsub.f32 %v1894, %v1913
      %v1978 = vsub.f32 %v1897, %v1914
      %v1979 = vmul.f32 %v1963, 1.442695
      %v1980 = vpow.pop %v1979
      %v1981 = vmul.f32 %v1964, 1.442695
      %v1982 = vpow.pop %v1981
      %v1983 = vmul.f32 %v1965, 1.442695
      %v1984 = vpow.pop %v1983
      %v1985 = vmul.f32 %v1966, 1.442695
      %v1986 = vpow.pop %v1985
      %v1987 = vmul.f32 %v1967, 1.442695
      %v1988 = vpow.pop %v1987
      %v1989 = vmul.f32 %v1968, 1.442695
      %v1990 = vpow.pop %v1989
      %v1991 = vmul.f32 %v1969, 1.442695
      %v1992 = vpow.pop %v1991
      %v1993 = vmul.f32 %v1970, 1.442695
      %v1994 = vpow.pop %v1993
      %v1995 = vmul.f32 %v1971, 1.442695
      %v1996 = vpow.pop %v1995
      %v1997 = vmul.f32 %v1972, 1.442695
      %v1998 = vpow.pop %v1997
      %v1999 = vmul.f32 %v1973, 1.442695
      %v2000 = vpow.pop %v1999
      %v2001 = vmul.f32 %v1974, 1.442695
      %v2002 = vpow.pop %v2001
      %v2003 = vmul.f32 %v1975, 1.442695
      %v2004 = vpow.pop %v2003
      %v2005 = vmul.f32 %v1976, 1.442695
      %v2006 = vpow.pop %v2005
      %v2007 = vmul.f32 %v1977, 1.442695
      %v2008 = vpow.pop %v2007
      %v2009 = vmul.f32 %v1978, 1.442695
      %v2010 = vpow.pop %v2009
      %v2011 = vadd.f32 %v1932, %v1980
      %v2012 = vadd.f32 %v1934, %v1982
      %v2013 = vadd.f32 %v1936, %v1984
      %v2014 = vadd.f32 %v1938, %v1986
      %v2015 = vadd.f32 %v1940, %v1988
      %v2016 = vadd.f32 %v1942, %v1990
      %v2017 = vadd.f32 %v1944, %v1992
      %v2018 = vadd.f32 %v1946, %v1994
      %v2019 = vadd.f32 %v1948, %v1996
      %v2020 = vadd.f32 %v1950, %v1998
      %v2021 = vadd.f32 %v1952, %v2000
      %v2022 = vadd.f32 %v1954, %v2002
      %v2023 = vadd.f32 %v1956, %v2004
      %v2024 = vadd.f32 %v1958, %v2006
      %v2025 = vadd.f32 %v1960, %v2008
      %v2026 = vadd.f32 %v1962, %v2010
      %v2027 = vrcp.pop %v2011
      %v2028 = vrcp.pop %v2012
      %v2029 = vrcp.pop %v2013
      %v2030 = vrcp.pop %v2014
      %v2031 = vrcp.pop %v2015
      %v2032 = vrcp.pop %v2016
      %v2033 = vrcp.pop %v2017
      %v2034 = vrcp.pop %v2018
      %v2035 = vrcp.pop %v2019
      %v2036 = vrcp.pop %v2020
      %v2037 = vrcp.pop %v2021
      %v2038 = vrcp.pop %v2022
      %v2039 = vrcp.pop %v2023
      %v2040 = vrcp.pop %v2024
      %v2041 = vrcp.pop %v2025
      %v2042 = vrcp.pop %v2026
      %v2043 = vmul.f32 %v1932, %v2027
      %v2044 = vmul.f32 %v1934, %v2028
      %v2045 = vmul.f32 %v1936, %v2029
      %v2046 = vmul.f32 %v1938, %v2030
      %v2047 = vmul.f32 %v1940, %v2031
      %v2048 = vmul.f32 %v1942, %v2032
      %v2049 = vmul.f32 %v1944, %v2033
      %v2050 = vmul.f32 %v1946, %v2034
      %v2051 = vmul.f32 %v1948, %v2035
      %v2052 = vmul.f32 %v1950, %v2036
      %v2053 = vmul.f32 %v1952, %v2037
      %v2054 = vmul.f32 %v1954, %v2038
      %v2055 = vmul.f32 %v1956, %v2039
      %v2056 = vmul.f32 %v1958, %v2040
      %v2057 = vmul.f32 %v1960, %v2041
      %v2058 = vmul.f32 %v1962, %v2042
      %v2059 = vld [vmem:[%s14] sm:$0xf]
      %vm2060 = vcmask 31744
      %v2062 = vsel %vm2060, %v2043, 0
      %v2065 = vsel %vm2060, %v2044, 0
      %v2068 = vsel %vm2060, %v2045, 0
      %v2071 = vsel %vm2060, %v2046, 0
      %v2074 = vsel %vm2060, %v2047, 0
      %v2077 = vsel %vm2060, %v2048, 0
      %v2080 = vsel %vm2060, %v2049, 0
      %v2083 = vsel %vm2060, %v2050, 0
      %v2086 = vsel %vm2060, %v2051, 0
      %v2089 = vsel %vm2060, %v2052, 0
      %v2092 = vsel %vm2060, %v2053, 0
      %v2095 = vsel %vm2060, %v2054, 0
      %v2098 = vsel %vm2060, %v2055, 0
      %v2101 = vsel %vm2060, %v2056, 0
      %v2104 = vsel %vm2060, %v2057, 0
      %v2107 = vsel %vm2060, %v2058, 0
      %vm2109 = vcmask 1043456
      %v2111 = vsel %vm2109, %v2059, 0
      %2113 = vmatpush.msra.mxu0 0.0
      %2114 = vmatpush.msra.mxu0 0.0
      %2115 = vmatpush.msra.mxu0 0.0
      %2116 = vmatpush.msra.mxu0 0.0
      %2117 = vmatpush.msra.mxu0 0.0
      %2118 = vmatpush.msra.mxu0 0.0
      %2119 = vmatpush.msra.mxu0 0.0
      %2120 = vmatpush.msra.mxu0 0.0
      %2121 = vmatpush.msra.mxu0 0.0
      %2122 = vmatpush.msra.mxu0 0.0
      %2123 = vmatpush.msra.mxu0 0.0
      %2124 = vmatpush.msra.mxu0 0.0
      %2125 = vmatpush.msra.mxu0 0.0
      %2126 = vmatpush.msra.mxu0 0.0
      %2127 = vmatpush.msra.mxu0 0.0
      %2128 = vmatpush.msra.mxu0 %v2111
      %2129 = vmatmul.f32.gmra.mxu0 %v2062
      %v2130 = vpop.f32.mrf.mxu0
      %v2131 = vadd.f32 0.0, %v2130
      %2132 = vmatmul.f32.gmra.mxu0 %v2065
      %v2133 = vpop.f32.mrf.mxu0
      %v2134 = vadd.f32 0.0, %v2133
      %2135 = vmatmul.f32.gmra.mxu0 %v2068
      %v2136 = vpop.f32.mrf.mxu0
      %v2137 = vadd.f32 0.0, %v2136
      %2138 = vmatmul.f32.gmra.mxu0 %v2071
      %v2139 = vpop.f32.mrf.mxu0
      %v2140 = vadd.f32 0.0, %v2139
      %2141 = vmatmul.f32.gmra.mxu0 %v2074
      %v2142 = vpop.f32.mrf.mxu0
      %v2143 = vadd.f32 0.0, %v2142
      %2144 = vmatmul.f32.gmra.mxu0 %v2077
      %v2145 = vpop.f32.mrf.mxu0
      %v2146 = vadd.f32 0.0, %v2145
      %2147 = vmatmul.f32.gmra.mxu0 %v2080
      %v2148 = vpop.f32.mrf.mxu0
      %v2149 = vadd.f32 0.0, %v2148
      %2150 = vmatmul.f32.gmra.mxu0 %v2083
      %v2151 = vpop.f32.mrf.mxu0
      %v2152 = vadd.f32 0.0, %v2151
      %2153 = vmatmul.f32.gmra.mxu0 %v2086
      %v2154 = vpop.f32.mrf.mxu0
      %v2155 = vadd.f32 0.0, %v2154
      %2156 = vmatmul.f32.gmra.mxu0 %v2089
      %v2157 = vpop.f32.mrf.mxu0
      %v2158 = vadd.f32 0.0, %v2157
      %2159 = vmatmul.f32.gmra.mxu0 %v2092
      %v2160 = vpop.f32.mrf.mxu0
      %v2161 = vadd.f32 0.0, %v2160
      %2162 = vmatmul.f32.gmra.mxu0 %v2095
      %v2163 = vpop.f32.mrf.mxu0
      %v2164 = vadd.f32 0.0, %v2163
      %2165 = vmatmul.f32.gmra.mxu0 %v2098
      %v2166 = vpop.f32.mrf.mxu0
      %v2167 = vadd.f32 0.0, %v2166
      %2168 = vmatmul.f32.gmra.mxu0 %v2101
      %v2169 = vpop.f32.mrf.mxu0
      %v2170 = vadd.f32 0.0, %v2169
      %2171 = vmatmul.f32.gmra.mxu0 %v2104
      %v2172 = vpop.f32.mrf.mxu0
      %v2173 = vadd.f32 0.0, %v2172
      %2174 = vmatmul.f32.gmra.mxu0 %v2107
      %v2175 = vpop.f32.mrf.mxu0
      %v2176 = vadd.f32 0.0, %v2175
      %2177 = vdwg.mxu0
      %v2178 = vsub.f32 %v1489, %v1529
      %v2179 = vsub.f32 %v1491, %v1531
      %v2180 = vsub.f32 %v1494, %v1534
      %v2181 = vsub.f32 %v1496, %v1536
      %v2182 = vsub.f32 %v1499, %v1539
      %v2183 = vsub.f32 %v1501, %v1541
      %v2184 = vsub.f32 %v1504, %v1544
      %v2185 = vsub.f32 %v1506, %v1546
      %v2186 = vsub.f32 %v1509, %v1549
      %v2187 = vsub.f32 %v1511, %v1551
      %v2188 = vsub.f32 %v1514, %v1554
      %v2189 = vsub.f32 %v1516, %v1556
      %v2190 = vsub.f32 %v1519, %v1559
      %v2191 = vsub.f32 %v1521, %v1561
      %v2192 = vsub.f32 %v1524, %v1564
      %v2193 = vsub.f32 %v1526, %v1566
      %v2194 = vmul.f32 %v2131, %v2178
      %v2195 = vmul.f32 %v2134, %v2179
      %v2196 = vmul.f32 %v2137, %v2180
      %v2197 = vmul.f32 %v2140, %v2181
      %v2198 = vmul.f32 %v2143, %v2182
      %v2199 = vmul.f32 %v2146, %v2183
      %v2200 = vmul.f32 %v2149, %v2184
      %v2201 = vmul.f32 %v2152, %v2185
      %v2202 = vmul.f32 %v2155, %v2186
      %v2203 = vmul.f32 %v2158, %v2187
      %v2204 = vmul.f32 %v2161, %v2188
      %v2205 = vmul.f32 %v2164, %v2189
      %v2206 = vmul.f32 %v2167, %v2190
      %v2207 = vmul.f32 %v2170, %v2191
      %v2208 = vmul.f32 %v2173, %v2192
      %v2209 = vmul.f32 %v2176, %v2193
      %v2210 = vadd.f32 %v1529, %v2194
      %v2211 = vadd.f32 %v1531, %v2195
      %v2212 = vadd.f32 %v1534, %v2196
      %v2213 = vadd.f32 %v1536, %v2197
      %v2214 = vadd.f32 %v1539, %v2198
      %v2215 = vadd.f32 %v1541, %v2199
      %v2216 = vadd.f32 %v1544, %v2200
      %v2217 = vadd.f32 %v1546, %v2201
      %v2218 = vadd.f32 %v1549, %v2202
      %v2219 = vadd.f32 %v1551, %v2203
      %v2220 = vadd.f32 %v1554, %v2204
      %v2221 = vadd.f32 %v1556, %v2205
      %v2222 = vadd.f32 %v1559, %v2206
      %v2223 = vadd.f32 %v1561, %v2207
      %v2224 = vadd.f32 %v1564, %v2208
      %v2225 = vadd.f32 %v1566, %v2209
      %v2226 = vpack.c.bf16 %v2211, %v2210
      %v2227 = vpack.c.bf16 %v2213, %v2212
      %v2228 = vpack.c.bf16 %v2215, %v2214
      %v2229 = vpack.c.bf16 %v2217, %v2216
      %v2230 = vpack.c.bf16 %v2219, %v2218
      %v2231 = vpack.c.bf16 %v2221, %v2220
      %v2232 = vpack.c.bf16 %v2223, %v2222
      %v2233 = vpack.c.bf16 %v2225, %v2224
      %v2234 = vld [vmem:[%s11] sm:$0xf]
      %v2235 = vld [vmem:[%s11 + $0x4] sm:$0xf]
      %v2236 = vld [vmem:[%s11 + $0x8] sm:$0xf]
      %v2237 = vld [vmem:[%s11 + $0xc] sm:$0xf]
      %v2238 = vld [vmem:[%s12] sm:$0x1]
      %v2240 = vperm.slane %v2238, 0
      %v2246 = vunpack.c.l.b16 %v2234
      %v2247 = vunpack.c.l.b16 %v2235
      %v2248 = vunpack.c.l.b16 %v2236
      %v2249 = vunpack.c.l.b16 %v2237
      %v2250 = vpack.c.b16 %v2247, %v2246
      %v2251 = vpack.c.b16 %v2249, %v2248
      %v2255 = vsel %vm563, %v2226, 0
      %v2258 = vsel %vm563, %v2227, 0
      %v2261 = vsel %vm563, %v2228, 0
      %v2264 = vsel %vm563, %v2229, 0
      %v2267 = vsel %vm563, %v2230, 0
      %v2270 = vsel %vm563, %v2231, 0
      %v2273 = vsel %vm563, %v2232, 0
      %v2276 = vsel %vm563, %v2233, 0
      %2278 = vmatpush.bf16.msra.mxu0 0
      %2279 = vmatpush.bf16.msra.mxu0 0
      %2280 = vmatpush.bf16.msra.mxu0 0
      %2281 = vmatpush.bf16.msra.mxu0 0
      %2282 = vmatpush.bf16.msra.mxu0 0
      %2283 = vmatpush.bf16.msra.mxu0 0
      %2284 = vmatpush.bf16.msra.mxu0 %v2251
      %2285 = vmatpush.bf16.msra.mxu0 %v2250
      %2286 = vmatmul.bf16.gmra.mxu0 %v2255
      %v2287 = vpop.f32.mrf.mxu0
      %v2288 = vadd.f32 %v2240, %v2287
      %v2289 = vpop.f32.mrf.mxu0
      %v2290 = vadd.f32 %v2240, %v2289
      %2291 = vmatmul.bf16.gmra.mxu0 %v2258
      %v2292 = vpop.f32.mrf.mxu0
      %v2293 = vadd.f32 %v2240, %v2292
      %v2294 = vpop.f32.mrf.mxu0
      %v2295 = vadd.f32 %v2240, %v2294
      %2296 = vmatmul.bf16.gmra.mxu0 %v2261
      %v2297 = vpop.f32.mrf.mxu0
      %v2298 = vadd.f32 %v2240, %v2297
      %v2299 = vpop.f32.mrf.mxu0
      %v2300 = vadd.f32 %v2240, %v2299
      %2301 = vmatmul.bf16.gmra.mxu0 %v2264
      %v2302 = vpop.f32.mrf.mxu0
      %v2303 = vadd.f32 %v2240, %v2302
      %v2304 = vpop.f32.mrf.mxu0
      %v2305 = vadd.f32 %v2240, %v2304
      %2306 = vmatmul.bf16.gmra.mxu0 %v2267
      %v2307 = vpop.f32.mrf.mxu0
      %v2308 = vadd.f32 %v2240, %v2307
      %v2309 = vpop.f32.mrf.mxu0
      %v2310 = vadd.f32 %v2240, %v2309
      %2311 = vmatmul.bf16.gmra.mxu0 %v2270
      %v2312 = vpop.f32.mrf.mxu0
      %v2313 = vadd.f32 %v2240, %v2312
      %v2314 = vpop.f32.mrf.mxu0
      %v2315 = vadd.f32 %v2240, %v2314
      %2316 = vmatmul.bf16.gmra.mxu0 %v2273
      %v2317 = vpop.f32.mrf.mxu0
      %v2318 = vadd.f32 %v2240, %v2317
      %v2319 = vpop.f32.mrf.mxu0
      %v2320 = vadd.f32 %v2240, %v2319
      %2321 = vmatmul.bf16.gmra.mxu0 %v2276
      %v2322 = vpop.f32.mrf.mxu0
      %v2323 = vadd.f32 %v2240, %v2322
      %v2324 = vpop.f32.mrf.mxu0
      %v2325 = vadd.f32 %v2240, %v2324
      %2326 = vdwg.mxu0
      %2327 = vst.msk [vmem:[%s496] sm:$0xff] %vm563, %v2288
      %2328 = vst.msk [vmem:[%s496 + $0x8] sm:$0xff] %vm563, %v2290
      %2329 = vst.msk [vmem:[%s496 + $0x10] sm:$0xff] %vm563, %v2293
      %2330 = vst.msk [vmem:[%s496 + $0x18] sm:$0xff] %vm563, %v2295
      %2331 = vst.msk [vmem:[%s496 + $0x20] sm:$0xff] %vm563, %v2298
      %2332 = vst.msk [vmem:[%s496 + $0x28] sm:$0xff] %vm563, %v2300
      %2333 = vst.msk [vmem:[%s496 + $0x30] sm:$0xff] %vm563, %v2303
      %2334 = vst.msk [vmem:[%s496 + $0x38] sm:$0xff] %vm563, %v2305
      %2335 = vst.msk [vmem:[%s496 + $0x40] sm:$0xff] %vm563, %v2308
      %2336 = vst.msk [vmem:[%s496 + $0x48] sm:$0xff] %vm563, %v2310
      %2337 = vst.msk [vmem:[%s496 + $0x50] sm:$0xff] %vm563, %v2313
      %2338 = vst.msk [vmem:[%s496 + $0x58] sm:$0xff] %vm563, %v2315
      %2339 = vst.msk [vmem:[%s496 + $0x60] sm:$0xff] %vm563, %v2318
      %2340 = vst.msk [vmem:[%s496 + $0x68] sm:$0xff] %vm563, %v2320
      %2341 = vst.msk [vmem:[%s496 + $0x70] sm:$0xff] %vm563, %v2323
      %2342 = vst.msk [vmem:[%s496 + $0x78] sm:$0xff] %vm563, %v2325
      %s2343 = smul.u32 16, %s26
      %p2344 = scmp.lt.s32.totalorder %s2343, 63
      %s2345 = scalar_select %p2344, %s2343, 63
      %s2346 = smul.addr %s2345, 8
      %s2347 = scalar_lea.vmem %s15, %s2346
      // Predicated region
      $region81: #{tpu_custom_call.1} parent=79 // pred_check
        %p2348 = pneg %p364
      $region82: #{tpu_custom_call.1} parent=79 // pred_check_branch
        %2350 = sbr.rel (%p2348) target = $region84
      $region83: #{tpu_custom_call.1} parent=79 // pred_region
        %s2351 = smul.u32 16, %s26
      $region84: #{tpu_custom_call.1} parent=79 // pred_fallthru
        _
    $region80: #{tpu_custom_call.1} parent=5 // pred_fallthru
      _
    %p2352 = scmp.le.s32.totalorder 2, %s21
    // Predicated region
    $region85: #{tpu_custom_call.1} parent=5 // pred_check
      %p2353 = pneg %p2352
    $region86: #{tpu_custom_call.1} parent=5 // pred_check_branch
      %2355 = sbr.rel (%p2353) target = $region88
    $region87: #{tpu_custom_call.1} parent=5 // pred_region
      %s2356 = ssub.s32 %s21, 2
      // Predicated region
      $region89: #{tpu_custom_call.1} parent=87 // pred_check
        %p2357 = pneg %p370
      $region90: #{tpu_custom_call.1} parent=87 // pred_check_branch
        %2359 = sbr.rel (%p2357) target = $region92
      $region91: #{tpu_custom_call.1} parent=87 // pred_region
        %s2360 = smul.u32 16, %s27
        %p2361 = scmp.lt.s32.totalorder %s2360, 63
        %s2362 = scalar_select %p2361, %s2360, 63
        %s2363 = smul.addr %s2362, 8
        %s2364 = scalar_lea.vmem %s15, %s2363
      $region92: #{tpu_custom_call.1} parent=87 // pred_fallthru
        _
    $region88: #{tpu_custom_call.1} parent=5 // pred_fallthru
      _
  $region6: #{tpu_custom_call.1} parent=0 // loop_footer
    %s25 = sadd.s32 1, %s21
  $region7: #{tpu_custom_call.1} parent=0 // loop_footer_branch
    %20 = sbr.rel target = $region3
  $region8: #{tpu_custom_call.1} parent=0 // loop_exit
    _

</llo_original>
